<compile_context>
chip_gen: v7x
topology: tpu7x:2x2x1
jax: 0.10.0
libtpu: 0.0.40
codegen_flags: <defaults>
</compile_context>

<pallas_src>
import jax
import jax.numpy as jnp
from jax.experimental import pallas as pl
from jax.experimental.pallas import tpu as pltpu


_EPS = 1e-12  # torch.nn.functional.normalize default eps


def _l2_normalize_rows(x):
    # x / max(||x||, eps)  ==  x * rsqrt(max(||x||^2, eps^2))   (EUP rsqrt)
    ssq = jnp.sum(x * x, axis=-1, keepdims=True)
    return x * jax.lax.rsqrt(jnp.maximum(ssq, _EPS * _EPS))


def _make_vq_kernel(K, tk, num_k):
    """Kernel factory.

    K     : number of *valid* codebook rows (before padding)
    tk    : codebook rows per K tile
    num_k : number of K tiles (grid axis 2 extent)
    """
    mask_tail = (num_k * tk != K)  # padded codebook rows must never win

    def kernel(z_ref, en_ref, ent_ref, zq_ref, idx_ref,
               zn_sc, max_sc, idx_sc, zq_sc):
        # z_ref  : (C, t_hw)  raw latent columns (tokens on lanes)
        # en_ref : (tk, C)    normalized codebook tile
        # ent_ref: (C, tk)    same tile, transposed (for the one-hot gather)
        # zq_ref : (C, t_hw)  quantized output tile
        # idx_ref: (1, t_hw)  argmin indices (lane-dense)
        k_id = pl.program_id(2)

        @pl.when(k_id == 0)
        def _():
            # Normalize the latent columns once per (b, j) tile; reuse over K.
            z = z_ref[...]
            ssq = jnp.sum(z * z, axis=0, keepdims=True)             # (1, t_hw)
            zn_sc[...] = z * jax.lax.rsqrt(jnp.maximum(ssq, _EPS * _EPS))
            max_sc[...] = jnp.full(max_sc.shape, -jnp.inf, max_sc.dtype)
            idx_sc[...] = jnp.zeros(idx_sc.shape, idx_sc.dtype)
            zq_sc[...] = jnp.zeros(zq_sc.shape, zq_sc.dtype)

        zn = zn_sc[...]                                             # (C, t_hw)

        # Cosine similarity against this codebook tile (one MXU matmul).
        # With unit-norm rows, argmin(distance) == argmax(similarity).
        sim = jnp.dot(en_ref[...], zn,
                      preferred_element_type=jnp.float32)           # (tk, t_hw)

        row = jax.lax.broadcasted_iota(jnp.int32, sim.shape, 0)
        if mask_tail:
            valid = (k_id * tk + row) < K
            sim = jnp.where(valid, sim, -jnp.inf)

        local_max = jnp.max(sim, axis=0, keepdims=True)             # (1, t_hw)
        # First occurrence within the tile (matches torch.argmin tie-break).
        local_arg = jnp.min(jnp.where(sim == local_max, row, tk),
                            axis=0, keepdims=True).astype(jnp.int32)

        # Gather the selected (already-normalized) codebook rows: one-hot MXU.
        onehot = (row == local_arg).astype(jnp.float32)             # (tk, t_hw)
        gathered = jnp.dot(ent_ref[...], onehot,
                           preferred_element_type=jnp.float32)      # (C, t_hw)

        # Strictly-greater keeps the earlier K tile on exact ties
        # (overall first-occurrence argmax, like torch.argmin).
        better = local_max > max_sc[...]                            # (1, t_hw)
        max_sc[...] = jnp.where(better, local_max, max_sc[...])
        idx_sc[...] = jnp.where(better, k_id * tk + local_arg, idx_sc[...])
        zq_sc[...] = jnp.where(better, gathered, zq_sc[...])

        @pl.when(k_id == num_k - 1)
        def _():
            # Forward value of z_n + (zq - z_n).detach() is just zq.
            zq_ref[...] = zq_sc[...]
            idx_ref[...] = idx_sc[...]

    return kernel


def _vmem_limit_bytes(C, t_hw, tk):
    f32 = 4
    est = 2 * 2 * C * t_hw * f32        # z in + zq out tiles, double-buffered
    est += 2 * t_hw * f32               # idx out tile
    est += 2 * 2 * tk * C * f32         # e_n + e_nT tiles, double-buffered
    est += (2 * C + 2) * t_hw * f32     # zn / zq / max / idx scratch
    est += 4 * tk * t_hw * f32          # sim / onehot / gathered live set
    # Cap well below physical VMEM (v7x has only 64 MiB per TC — leave the
    # compiler internal-scratch headroom).
    return int(min(max(int(1.5 * est), 32 * 1024 * 1024), 48 * 1024 * 1024))


def vector_quantize(z_nchw, embedding, *, t_hw_target=2048, tk_target=512):
    """Pallas equivalent of VectorQuantizer.forward (NCHW in / NCHW out).

    Returns (z_quantized (B, C, H, W) float32, indices (B, H, W) int32).
    """
    B, C, H, W = z_nchw.shape
    K, Ce = embedding.shape
    assert C == Ce, "channel dim must equal codebook token_size"
    HW = H * W

    z = z_nchw.astype(jnp.float32).reshape(B, C, HW)
    # Hoisted once: codebook normalization (and its transpose) are grid-invariant.
    e_n = _l2_normalize_rows(embedding.astype(jnp.float32))          # (K, C)

    # ---- token (lane) tiling over H*W ----------------------------------
    if HW > t_hw_target:
        t_hw = t_hw_target                           # multiple of 128
    elif B == 1 and HW >= 256:
        # Split so both v7x TensorCores get work; keep lanes 128-aligned.
        t_hw = pl.cdiv(pl.cdiv(HW, 2), 128) * 128
    else:
        t_hw = HW                                    # full-dim block (any size ok)
    HW_pad = pl.cdiv(HW, t_hw) * t_hw
    if HW_pad != HW:
        z = jnp.pad(z, ((0, 0), (0, 0), (0, HW_pad - HW)))  # zero tokens -> idx 0, sliced off
    num_hw = HW_pad // t_hw

    # ---- codebook (sublane) tiling over K ------------------------------
    if K > tk_target:
        tk = tk_target                               # multiple of 8 and of 128
        K_pad = pl.cdiv(K, tk) * tk
    else:
        tk = K
        K_pad = K
    if K_pad != K:
        e_n = jnp.pad(e_n, ((0, K_pad - K), (0, 0)))  # zero rows, masked in-kernel
    num_k = K_pad // tk
    e_nT = e_n.T                                     # (C, K_pad)

    kernel = _make_vq_kernel(K, tk, num_k)

    cost = pl.CostEstimate(
        flops=4 * B * HW * C * K,                    # similarity + one-hot gather
        transcendentals=B * HW,                      # per-token rsqrt
        bytes_accessed=4 * (2 * B * C * HW + 2 * K * C + B * HW),
    )

    zq, idx = pl.pallas_call(
        kernel,
        out_shape=(jax.ShapeDtypeStruct((B, C, HW_pad), jnp.float32),
                   jax.ShapeDtypeStruct((B, 1, HW_pad), jnp.int32)),
        grid_spec=pltpu.PrefetchScalarGridSpec(
            num_scalar_prefetch=0,
            grid=(B, num_hw, num_k),
            in_specs=[
                pl.BlockSpec((None, C, t_hw), lambda b, j, k: (b, 0, j)),  # latents
                pl.BlockSpec((tk, C), lambda b, j, k: (k, 0)),             # codebook tile
                pl.BlockSpec((C, tk), lambda b, j, k: (0, k)),             # codebook tile^T
            ],
            out_specs=(
                pl.BlockSpec((None, C, t_hw), lambda b, j, k: (b, 0, j)),  # zq
                pl.BlockSpec((None, 1, t_hw), lambda b, j, k: (b, 0, j)),  # indices
            ),
            scratch_shapes=[
                pltpu.VMEM((C, t_hw), jnp.float32),   # normalized latent columns
                pltpu.VMEM((1, t_hw), jnp.float32),   # running max similarity
                pltpu.VMEM((1, t_hw), jnp.int32),     # running argmax index
                pltpu.VMEM((C, t_hw), jnp.float32),   # running gathered codebook col
            ]),
        compiler_params=pltpu.CompilerParams(
            dimension_semantics=("parallel", "parallel", "arbitrary"),
            vmem_limit_bytes=_vmem_limit_bytes(C, t_hw, tk)),
        cost_estimate=cost,
    )(z, e_n, e_nT)

    if HW_pad != HW:
        zq = zq[:, :, :HW]
        idx = idx[:, :, :HW]
    z_quantized = zq.reshape(B, C, H, W)
    min_encoding_indices = idx.reshape(B, H, W)
    return z_quantized, min_encoding_indices


if __name__ == "__main__":
    # Small shapes consistent with the module; K chosen non-multiple-of-128 so
    # the forced-streaming run below also exercises the padded-K mask path.
    codebook_size = 320
    token_size = 32
    B, H, W = 2, 8, 8

    key = jax.random.PRNGKey(0)
    k_emb, k_x = jax.random.split(key)

    # torch.nn.Embedding weight, .uniform_(-1/codebook_size, 1/codebook_size)
    embedding = jax.random.uniform(
        k_emb, (codebook_size, token_size), dtype=jnp.float32,
        minval=-1.0 / codebook_size, maxval=1.0 / codebook_size)
    x = jax.random.normal(k_x, (B, token_size, H, W), dtype=jnp.float32)

    # Pure-JAX reference using the module's original distance formula.
    N = B * H * W
    zf = jnp.transpose(x, (0, 2, 3, 1)).reshape(N, token_size)
    zf_n = zf / jnp.maximum(jnp.linalg.norm(zf, axis=-1, keepdims=True), 1e-12)
    e_n_ref = embedding / jnp.maximum(
        jnp.linalg.norm(embedding, axis=-1, keepdims=True), 1e-12)
    d_ref = (jnp.sum(zf_n ** 2, 1, keepdims=True) + jnp.sum(e_n_ref ** 2, 1)
             - 2.0 * jnp.dot(zf_n, e_n_ref.T, precision=jax.lax.Precision.HIGHEST))
    idx_ref = jnp.argmin(d_ref, axis=1).astype(jnp.int32)

    def check(z_q, indices):
        assert z_q.shape == (B, token_size, H, W) and z_q.dtype == jnp.float32
        assert indices.shape == (B, H, W) and indices.dtype == jnp.int32
        idx_k = indices.reshape(-1)
        # Exact match expected; fall back to "chosen code attains the minimum
        # distance" to be robust against bit-level argmin ties.
        exact = bool(jnp.array_equal(idx_k, idx_ref))
        d_sel = d_ref[jnp.arange(N), idx_k]
        optimal = bool(jnp.allclose(d_sel, jnp.min(d_ref, axis=1), atol=1e-5))
        assert exact or optimal, "kernel indices are not distance-optimal"
        zq_flat = jnp.transpose(z_q, (0, 2, 3, 1)).reshape(N, token_size)
        assert jnp.allclose(zq_flat, e_n_ref[idx_k], atol=1e-5)

    # 1) default path: whole codebook resident (single K tile).
    z_q, indices = vector_quantize(x, embedding)
    jax.block_until_ready((z_q, indices))
    check(z_q, indices)

    # 2) forced K-streaming path (tk=128 -> 3 K tiles + masked padded tail).
    z_q2, indices2 = vector_quantize(x, embedding, tk_target=128)
    jax.block_until_ready((z_q2, indices2))
    check(z_q2, indices2)

    print("KERNEL_OK")
</pallas_src>

<mosaic_0001>
module attributes {stable_mosaic.version = 11 : i64} {
  func.func @kernel(%arg0: i32, %arg1: i32, %arg2: i32, %arg3: memref<1x32x64xf32, #tpu.memory_space<vmem>>, %arg4: memref<320x32xf32, #tpu.memory_space<vmem>>, %arg5: memref<32x320xf32, #tpu.memory_space<vmem>>, %arg6: memref<1x32x64xf32, #tpu.memory_space<vmem>>, %arg7: memref<1x1x64xi32, #tpu.memory_space<vmem>>, %arg8: memref<32x64xf32, #tpu.memory_space<vmem>>, %arg9: memref<1x64xf32, #tpu.memory_space<vmem>>, %arg10: memref<1x64xi32, #tpu.memory_space<vmem>>, %arg11: memref<32x64xf32, #tpu.memory_space<vmem>>) attributes {dimension_semantics = [#tpu.dimension_semantics<parallel>, #tpu.dimension_semantics<parallel>, #tpu.dimension_semantics<arbitrary>], iteration_bounds = array<i64: 2, 1, 1>, scalar_prefetch = 0 : i64, scratch_operands = 4 : i64, tpu.core_type = #tpu.core_type<tc>, window_params = [{transform_indices = @transform_0, window_bounds = array<i64: 1, 32, 64>}, {transform_indices = @transform_1, window_bounds = array<i64: 320, 32>}, {transform_indices = @transform_2, window_bounds = array<i64: 32, 320>}, {transform_indices = @transform_3, window_bounds = array<i64: 1, 32, 64>}, {transform_indices = @transform_4, window_bounds = array<i64: 1, 1, 64>}]} {
    %c0_i32 = arith.constant 0 : i32
    %0 = arith.cmpi eq, %arg2, %c0_i32 : i32
    %1 = arith.extui %0 : i1 to i32
    %c0_i32_0 = arith.constant 0 : i32
    %2 = arith.cmpi ne, %1, %c0_i32_0 : i32
    scf.if %2 {
      %c0_26 = arith.constant 0 : index
      %c0_27 = arith.constant 0 : index
      %c0_28 = arith.constant 0 : index
      %40 = vector.load %arg3[%c0_26, %c0_27, %c0_28] : memref<1x32x64xf32, #tpu.memory_space<vmem>>, vector<1x32x64xf32>
      %41 = vector.shape_cast %40 : vector<1x32x64xf32> to vector<32x64xf32>
      %42 = arith.mulf %41, %41 : vector<32x64xf32>
      %cst_29 = arith.constant dense<0.000000e+00> : vector<64xf32>
      %43 = vector.multi_reduction <add>, %42, %cst_29 [0] : vector<32x64xf32> to vector<64xf32>
      %44 = vector.shape_cast %43 : vector<64xf32> to vector<1x64xf32>
      %cst_30 = arith.constant 1.000000e-24 : f32
      %45 = vector.broadcast %cst_30 : f32 to vector<1x64xf32>
      %46 = arith.maximumf %44, %45 : vector<1x64xf32>
      %47 = math.rsqrt %46 : vector<1x64xf32>
      %48 = vector.broadcast %47 : vector<1x64xf32> to vector<32x64xf32>
      %49 = arith.mulf %41, %48 : vector<32x64xf32>
      %c0_31 = arith.constant 0 : index
      %c0_32 = arith.constant 0 : index
      %50 = vector.load %arg8[%c0_31, %c0_32] : memref<32x64xf32, #tpu.memory_space<vmem>>, vector<32x64xf32>
      tpu.vector_store %arg8[%c0_31, %c0_32], %49 {strides = array<i32>} : memref<32x64xf32, #tpu.memory_space<vmem>>, vector<32x64xf32>,
      %cst_33 = arith.constant 0xFF800000 : f32
      %51 = vector.broadcast %cst_33 : f32 to vector<1x64xf32>
      %c0_34 = arith.constant 0 : index
      %c0_35 = arith.constant 0 : index
      %52 = vector.load %arg9[%c0_34, %c0_35] : memref<1x64xf32, #tpu.memory_space<vmem>>, vector<1x64xf32>
      tpu.vector_store %arg9[%c0_34, %c0_35], %51 {strides = array<i32>} : memref<1x64xf32, #tpu.memory_space<vmem>>, vector<1x64xf32>,
      %c0_i32_36 = arith.constant 0 : i32
      %53 = vector.broadcast %c0_i32_36 : i32 to vector<1x64xi32>
      %c0_37 = arith.constant 0 : index
      %c0_38 = arith.constant 0 : index
      %54 = vector.load %arg10[%c0_37, %c0_38] : memref<1x64xi32, #tpu.memory_space<vmem>>, vector<1x64xi32>
      tpu.vector_store %arg10[%c0_37, %c0_38], %53 {strides = array<i32>} : memref<1x64xi32, #tpu.memory_space<vmem>>, vector<1x64xi32>,
      %cst_39 = arith.constant 0.000000e+00 : f32
      %55 = vector.broadcast %cst_39 : f32 to vector<32x64xf32>
      %c0_40 = arith.constant 0 : index
      %c0_41 = arith.constant 0 : index
      %56 = vector.load %arg11[%c0_40, %c0_41] : memref<32x64xf32, #tpu.memory_space<vmem>>, vector<32x64xf32>
      tpu.vector_store %arg11[%c0_40, %c0_41], %55 {strides = array<i32>} : memref<32x64xf32, #tpu.memory_space<vmem>>, vector<32x64xf32>,
    } else {
    }
    %c0 = arith.constant 0 : index
    %c0_1 = arith.constant 0 : index
    %3 = vector.load %arg8[%c0, %c0_1] : memref<32x64xf32, #tpu.memory_space<vmem>>, vector<32x64xf32>
    %c0_2 = arith.constant 0 : index
    %c0_3 = arith.constant 0 : index
    %4 = vector.load %arg4[%c0_2, %c0_3] : memref<320x32xf32, #tpu.memory_space<vmem>>, vector<320x32xf32>
    %cst = arith.constant dense<0.000000e+00> : vector<320x64xf32>
    %5 = tpu.matmul %4, %3, %cst {dimension_numbers = #tpu.dot_dimension_numbers<[1], [0], [0], [1], [0, 0, 1, 1], [], []>} : vector<320x32xf32>, vector<32x64xf32>, vector<320x64xf32> -> vector<320x64xf32>
    %6 = tpu.iota {dimensions = array<i32: 0>} : vector<320x64xi32>
    %cst_4 = arith.constant dense<0xFF800000> : vector<64xf32>
    %7 = vector.multi_reduction <maximumf>, %5, %cst_4 [0] : vector<320x64xf32> to vector<64xf32>
    %8 = vector.shape_cast %7 : vector<64xf32> to vector<1x64xf32>
    %9 = vector.broadcast %8 : vector<1x64xf32> to vector<320x64xf32>
    %10 = arith.cmpf oeq, %5, %9 : vector<320x64xf32>
    %c320_i32 = arith.constant 320 : i32
    %11 = vector.broadcast %c320_i32 : i32 to vector<320x64xi32>
    %12 = arith.select %10, %6, %11 : vector<320x64xi1>, vector<320x64xi32>
    %cst_5 = arith.constant dense<2147483647> : vector<64xi32>
    %13 = vector.multi_reduction <minsi>, %12, %cst_5 [0] : vector<320x64xi32> to vector<64xi32>
    %14 = vector.shape_cast %13 : vector<64xi32> to vector<1x64xi32>
    %15 = vector.broadcast %14 : vector<1x64xi32> to vector<320x64xi32>
    %16 = arith.cmpi eq, %6, %15 : vector<320x64xi32>
    %17 = arith.extui %16 : vector<320x64xi1> to vector<320x64xi32>
    %18 = arith.sitofp %17 : vector<320x64xi32> to vector<320x64xf32>
    %c0_6 = arith.constant 0 : index
    %c0_7 = arith.constant 0 : index
    %19 = vector.load %arg5[%c0_6, %c0_7] : memref<32x320xf32, #tpu.memory_space<vmem>>, vector<32x320xf32>
    %cst_8 = arith.constant dense<0.000000e+00> : vector<32x64xf32>
    %20 = tpu.matmul %19, %18, %cst_8 {dimension_numbers = #tpu.dot_dimension_numbers<[1], [0], [0], [1], [0, 0, 1, 1], [], []>} : vector<32x320xf32>, vector<320x64xf32>, vector<32x64xf32> -> vector<32x64xf32>
    %c0_9 = arith.constant 0 : index
    %c0_10 = arith.constant 0 : index
    %21 = vector.load %arg9[%c0_9, %c0_10] : memref<1x64xf32, #tpu.memory_space<vmem>>, vector<1x64xf32>
    %22 = arith.cmpf ogt, %8, %21 : vector<1x64xf32>
    %c0_11 = arith.constant 0 : index
    %c0_12 = arith.constant 0 : index
    %23 = vector.load %arg9[%c0_11, %c0_12] : memref<1x64xf32, #tpu.memory_space<vmem>>, vector<1x64xf32>
    %24 = arith.select %22, %8, %23 : vector<1x64xi1>, vector<1x64xf32>
    %c0_13 = arith.constant 0 : index
    %c0_14 = arith.constant 0 : index
    %25 = vector.load %arg9[%c0_13, %c0_14] : memref<1x64xf32, #tpu.memory_space<vmem>>, vector<1x64xf32>
    tpu.vector_store %arg9[%c0_13, %c0_14], %24 {strides = array<i32>} : memref<1x64xf32, #tpu.memory_space<vmem>>, vector<1x64xf32>,
    %c320_i32_15 = arith.constant 320 : i32
    %26 = arith.muli %arg2, %c320_i32_15 : i32
    %27 = vector.broadcast %26 : i32 to vector<1x64xi32>
    %28 = arith.addi %27, %14 : vector<1x64xi32>
    %c0_16 = arith.constant 0 : index
    %c0_17 = arith.constant 0 : index
    %29 = vector.load %arg10[%c0_16, %c0_17] : memref<1x64xi32, #tpu.memory_space<vmem>>, vector<1x64xi32>
    %30 = arith.select %22, %28, %29 : vector<1x64xi1>, vector<1x64xi32>
    %c0_18 = arith.constant 0 : index
    %c0_19 = arith.constant 0 : index
    %31 = vector.load %arg10[%c0_18, %c0_19] : memref<1x64xi32, #tpu.memory_space<vmem>>, vector<1x64xi32>
    tpu.vector_store %arg10[%c0_18, %c0_19], %30 {strides = array<i32>} : memref<1x64xi32, #tpu.memory_space<vmem>>, vector<1x64xi32>,
    %c0_20 = arith.constant 0 : index
    %c0_21 = arith.constant 0 : index
    %32 = vector.load %arg11[%c0_20, %c0_21] : memref<32x64xf32, #tpu.memory_space<vmem>>, vector<32x64xf32>
    %33 = vector.shape_cast %22 : vector<1x64xi1> to vector<1x64xi1>
    %34 = vector.broadcast %33 : vector<1x64xi1> to vector<32x64xi1>
    %35 = arith.select %34, %20, %32 : vector<32x64xi1>, vector<32x64xf32>
    %c0_22 = arith.constant 0 : index
    %c0_23 = arith.constant 0 : index
    %36 = vector.load %arg11[%c0_22, %c0_23] : memref<32x64xf32, #tpu.memory_space<vmem>>, vector<32x64xf32>
    tpu.vector_store %arg11[%c0_22, %c0_23], %35 {strides = array<i32>} : memref<32x64xf32, #tpu.memory_space<vmem>>, vector<32x64xf32>,
    %c0_i32_24 = arith.constant 0 : i32
    %37 = arith.cmpi eq, %arg2, %c0_i32_24 : i32
    %38 = arith.extui %37 : i1 to i32
    %c0_i32_25 = arith.constant 0 : i32
    %39 = arith.cmpi ne, %38, %c0_i32_25 : i32
    scf.if %39 {
      %c0_26 = arith.constant 0 : index
      %c0_27 = arith.constant 0 : index
      %40 = vector.load %arg11[%c0_26, %c0_27] : memref<32x64xf32, #tpu.memory_space<vmem>>, vector<32x64xf32>
      %c0_28 = arith.constant 0 : index
      %c0_29 = arith.constant 0 : index
      %c0_30 = arith.constant 0 : index
      %41 = vector.load %arg6[%c0_28, %c0_29, %c0_30] : memref<1x32x64xf32, #tpu.memory_space<vmem>>, vector<1x32x64xf32>
      %42 = vector.shape_cast %41 : vector<1x32x64xf32> to vector<32x64xf32>
      %43 = vector.shape_cast %40 : vector<32x64xf32> to vector<1x32x64xf32>
      tpu.vector_store %arg6[%c0_28, %c0_29, %c0_30], %43 {strides = array<i32>} : memref<1x32x64xf32, #tpu.memory_space<vmem>>, vector<1x32x64xf32>,
      %c0_31 = arith.constant 0 : index
      %c0_32 = arith.constant 0 : index
      %44 = vector.load %arg10[%c0_31, %c0_32] : memref<1x64xi32, #tpu.memory_space<vmem>>, vector<1x64xi32>
      %c0_33 = arith.constant 0 : index
      %c0_34 = arith.constant 0 : index
      %c0_35 = arith.constant 0 : index
      %45 = vector.load %arg7[%c0_33, %c0_34, %c0_35] : memref<1x1x64xi32, #tpu.memory_space<vmem>>, vector<1x1x64xi32>
      %46 = vector.shape_cast %45 : vector<1x1x64xi32> to vector<1x64xi32>
      %47 = vector.shape_cast %44 : vector<1x64xi32> to vector<1x1x64xi32>
      tpu.vector_store %arg7[%c0_33, %c0_34, %c0_35], %47 {strides = array<i32>} : memref<1x1x64xi32, #tpu.memory_space<vmem>>, vector<1x1x64xi32>,
    } else {
    }
    return
  }
  func.func @transform_0(%arg0: i32, %arg1: i32, %arg2: i32) -> (i32, i32, i32) {
    %c0_i32 = arith.constant 0 : i32
    %c0_i32_0 = arith.constant 0 : i32
    return %arg0, %c0_i32, %arg1 : i32, i32, i32
  }
  func.func @transform_1(%arg0: i32, %arg1: i32, %arg2: i32) -> (i32, i32) {
    %c0_i32 = arith.constant 0 : i32
    %c0_i32_0 = arith.constant 0 : i32
    return %arg2, %c0_i32 : i32, i32
  }
  func.func @transform_2(%arg0: i32, %arg1: i32, %arg2: i32) -> (i32, i32) {
    %c0_i32 = arith.constant 0 : i32
    %c0_i32_0 = arith.constant 0 : i32
    return %c0_i32, %arg2 : i32, i32
  }
  func.func @transform_3(%arg0: i32, %arg1: i32, %arg2: i32) -> (i32, i32, i32) {
    %c0_i32 = arith.constant 0 : i32
    %c0_i32_0 = arith.constant 0 : i32
    return %arg0, %c0_i32, %arg1 : i32, i32, i32
  }
  func.func @transform_4(%arg0: i32, %arg1: i32, %arg2: i32) -> (i32, i32, i32) {
    %c0_i32 = arith.constant 0 : i32
    %c0_i32_0 = arith.constant 0 : i32
    return %arg0, %c0_i32, %arg1 : i32, i32, i32
  }
}

</mosaic_0001>

<llo_original>
// kernel: tpu_custom_call.1
$region0: #{tpu_custom_call.1}
  #allocation0 [shape = 'u32[]', space=smem, size = 0x4, offset = 0x4, fixed_abs, tag = 'smem constant byte address 0x4 - core index']
  #allocation1 [shape = 'u32[144,128]{1,0:T(1,128)}', space=vmem, size = 0x12000, scoped, tag = 'internal scratch']
  #allocation2 [shape = 'f32[32,64]{1,0:T(8,128)}', space=vmem, size = 0x4000, scoped, tag = 'scratch operand']
  #allocation3 [shape = 'f32[1,64]{1,0:T(1,128)}', space=vmem, size = 0x200, scoped, tag = 'scratch operand']
  #allocation4 [shape = 's32[1,64]{1,0:T(1,128)}', space=vmem, size = 0x200, scoped, tag = 'scratch operand']
  #allocation5 [shape = 'f32[32,64]{1,0:T(8,128)}', space=vmem, size = 0x4000, scoped, tag = 'scratch operand']
  %s0 = inlined_call_operand.vmem [shape: f32[2,32,64], index: 0, kind: input, shape index: {}]
  %s1 = inlined_call_operand.vmem [shape: f32[320,32], index: 1, kind: input, shape index: {}]
  %s2 = inlined_call_operand.vmem [shape: f32[32,320], index: 2, kind: input, shape index: {}]
  %s3 = inlined_call_operand.hbm [shape: f32[2,32,64], index: 3, kind: output, shape index: {0}]
  %s4 = inlined_call_operand.hbm [shape: s32[2,1,64], index: 4, kind: output, shape index: {1}]
  %5 = xla_tuple %s3, %s4
  %s6 = sld [smem:[#allocation0]]
  $region61: #{tpu_custom_call.1} parent=0
    _
  %s8 = ssub.s32 1, %s6
  %s9 = scalar_select 0, %s8, %s6
  $region1: #{tpu_custom_call.1} parent=0
    #allocation6 [shape = 'u8[32768]{0}', space=vmem, size = 0x8000, scoped, tag = 'output window, operand 0']
    #allocation7 [shape = 's32[2]{0}', space=sflag, size = 0x8, scoped, tag = 'scoped memory for tpu_custom_call.1']
    #allocation8 [shape = 'u8[1024]{0}', space=vmem, size = 0x400, scoped, tag = 'output window, operand 1']
    #allocation9 [shape = 's32[2]{0}', space=sflag, size = 0x8, scoped, tag = 'scoped memory for tpu_custom_call.1']
    %10 = vsyncpa [#allocation7], 0
    %s11 = scalar_lea.sflag [#allocation7], 1
    %12 = vsyncpa %s11, 0
    %13 = vsyncpa [#allocation9], 0
    %s14 = scalar_lea.sflag [#allocation9], 1
    %15 = vsyncpa %s14, 0
    loop: start=0, step=1, limit=4
    $region2: #{tpu_custom_call.1} parent=1 // loop_pre_header
      _
    $region3: #{tpu_custom_call.1} parent=1 // loop_header
      %s17 = sphi 0, %s21
      %p18 = scmp.ge.s32.totalorder %s17, 4
      %s24 = sphi 0, %s43
      %s25 = sphi 0, %s39
      %s26 = sphi 0, %s35
      %s27 = sphi 0, %s24
      %s28 = sphi 0, %s25
      %s29 = sphi 0, %s26
      %s30 = sphi 0, %s27
      %s31 = sphi 0, %s28
      %s32 = sphi 0, %s29
      %s48 = sphi 0, %s50
      %s51 = sphi 0, %s48
      %s52 = sphi 0, %s51
      %s68 = sphi 0, %s52
      %s74 = sphi 0, %s76
      %s77 = sphi 0, %s74
      %s78 = sphi 0, %s77
      %s94 = sphi 0, %s78
      %s100 = sphi 0, %s102
      %s103 = sphi 0, %s100
      %s104 = sphi 0, %s103
      %s120 = sphi 0, %s104
      %s128 = sphi 0, %s130
      %s131 = sphi 0, %s128
      %s132 = sphi 0, %s131
      %s148 = sphi 0, %s132
      %s156 = sphi 0, %s158
      %s159 = sphi 0, %s156
      %s160 = sphi 0, %s159
      %s176 = sphi 0, %s160
    $region4: #{tpu_custom_call.1} parent=1 // loop_header_branch
      %20 = sbr.rel (%p18) target = $region8
    $region5: #{tpu_custom_call.1} parent=1 // loop_body
      %s22 = ssub.s32 %s17, 1
      %s23 = ssub.s32 %s17, 2
      %s33 = sadd.s32 1, %s26
      %p34 = scmp.ge.s32.totalorder %s33, 1
      %s35 = scalar_select %p34, 0, %s33
      %s36 = sadd.s32 1, %s25
      %s37 = scalar_select %p34, %s36, %s25
      %p38 = scmp.ge.s32.totalorder %s37, 1
      %s39 = scalar_select %p38, 0, %s37
      %s40 = sadd.s32 1, %s24
      %s41 = scalar_select %p38, %s40, %s24
      %p42 = scmp.ge.s32.totalorder %s41, 2
      %s43 = scalar_select %p42, 0, %s41
      %s44 = ssub.s32 %s24, %s43
      %s45 = ssub.s32 %s25, %s39
      %s46 = sor.u32 %s44, %s45
      %p47 = scmp.eq.s32.totalorder %s46, 0
      %s49 = sadd.s32 %s48, 1
      %s50 = scalar_select %p47, %s48, %s49
      %p53 = pneg %p47
      %p54 = scmp.eq.s32.totalorder %s17, 1
      %p55 = por %p53, %p54
      %p56 = scmp.ne.s32.totalorder %s48, %s51
      %p57 = scmp.eq.s32.totalorder %s17, 0
      %p58 = por %p56, %p57
      %p59 = scmp.ne.s32.totalorder %s48, %s51
      %p60 = scmp.eq.s32.totalorder %s22, 1
      %p61 = por %p59, %p60
      %p62 = scmp.ne.s32.totalorder %s51, %s52
      %p63 = scmp.eq.s32.totalorder %s22, 0
      %p64 = por %p62, %p63
      %p65 = scmp.ne.s32.totalorder %s51, %s52
      %p66 = scmp.eq.s32.totalorder %s23, 1
      %p67 = por %p65, %p66
      %p69 = scmp.ne.s32.totalorder %s52, %s68
      %p70 = scmp.eq.s32.totalorder %s23, 0
      %p71 = por %p69, %p70
      %s72 = ssub.s32 %s26, %s35
      %p73 = scmp.eq.s32.totalorder %s72, 0
      %s75 = sadd.s32 %s74, 1
      %s76 = scalar_select %p73, %s74, %s75
      %p79 = pneg %p73
      %p80 = scmp.eq.s32.totalorder %s17, 1
      %p81 = por %p79, %p80
      %p82 = scmp.ne.s32.totalorder %s74, %s77
      %p83 = scmp.eq.s32.totalorder %s17, 0
      %p84 = por %p82, %p83
      %p85 = scmp.ne.s32.totalorder %s74, %s77
      %p86 = scmp.eq.s32.totalorder %s22, 1
      %p87 = por %p85, %p86
      %p88 = scmp.ne.s32.totalorder %s77, %s78
      %p89 = scmp.eq.s32.totalorder %s22, 0
      %p90 = por %p88, %p89
      %p91 = scmp.ne.s32.totalorder %s77, %s78
      %p92 = scmp.eq.s32.totalorder %s23, 1
      %p93 = por %p91, %p92
      %p95 = scmp.ne.s32.totalorder %s78, %s94
      %p96 = scmp.eq.s32.totalorder %s23, 0
      %p97 = por %p95, %p96
      %s98 = ssub.s32 %s26, %s35
      %p99 = scmp.eq.s32.totalorder %s98, 0
      %s101 = sadd.s32 %s100, 1
      %s102 = scalar_select %p99, %s100, %s101
      %p105 = pneg %p99
      %p106 = scmp.eq.s32.totalorder %s17, 1
      %p107 = por %p105, %p106
      %p108 = scmp.ne.s32.totalorder %s100, %s103
      %p109 = scmp.eq.s32.totalorder %s17, 0
      %p110 = por %p108, %p109
      %p111 = scmp.ne.s32.totalorder %s100, %s103
      %p112 = scmp.eq.s32.totalorder %s22, 1
      %p113 = por %p111, %p112
      %p114 = scmp.ne.s32.totalorder %s103, %s104
      %p115 = scmp.eq.s32.totalorder %s22, 0
      %p116 = por %p114, %p115
      %p117 = scmp.ne.s32.totalorder %s103, %s104
      %p118 = scmp.eq.s32.totalorder %s23, 1
      %p119 = por %p117, %p118
      %p121 = scmp.ne.s32.totalorder %s104, %s120
      %p122 = scmp.eq.s32.totalorder %s23, 0
      %p123 = por %p121, %p122
      %s124 = ssub.s32 %s24, %s43
      %s125 = ssub.s32 %s25, %s39
      %s126 = sor.u32 %s124, %s125
      %p127 = scmp.eq.s32.totalorder %s126, 0
      %s129 = sadd.s32 %s128, 1
      %s130 = scalar_select %p127, %s128, %s129
      %p133 = pneg %p127
      %p134 = scmp.eq.s32.totalorder %s17, 1
      %p135 = por %p133, %p134
      %p136 = scmp.ne.s32.totalorder %s128, %s131
      %p137 = scmp.eq.s32.totalorder %s17, 0
      %p138 = por %p136, %p137
      %p139 = scmp.ne.s32.totalorder %s128, %s131
      %p140 = scmp.eq.s32.totalorder %s22, 1
      %p141 = por %p139, %p140
      %p142 = scmp.ne.s32.totalorder %s131, %s132
      %p143 = scmp.eq.s32.totalorder %s22, 0
      %p144 = por %p142, %p143
      %p145 = scmp.ne.s32.totalorder %s131, %s132
      %p146 = scmp.eq.s32.totalorder %s23, 1
      %p147 = por %p145, %p146
      %p149 = scmp.ne.s32.totalorder %s132, %s148
      %p150 = scmp.eq.s32.totalorder %s23, 0
      %p151 = por %p149, %p150
      %s152 = ssub.s32 %s24, %s43
      %s153 = ssub.s32 %s25, %s39
      %s154 = sor.u32 %s152, %s153
      %p155 = scmp.eq.s32.totalorder %s154, 0
      %s157 = sadd.s32 %s156, 1
      %s158 = scalar_select %p155, %s156, %s157
      %p161 = pneg %p155
      %p162 = scmp.eq.s32.totalorder %s17, 1
      %p163 = por %p161, %p162
      %p164 = scmp.ne.s32.totalorder %s156, %s159
      %p165 = scmp.eq.s32.totalorder %s17, 0
      %p166 = por %p164, %p165
      %p167 = scmp.ne.s32.totalorder %s156, %s159
      %p168 = scmp.eq.s32.totalorder %s22, 1
      %p169 = por %p167, %p168
      %p170 = scmp.ne.s32.totalorder %s159, %s160
      %p171 = scmp.eq.s32.totalorder %s22, 0
      %p172 = por %p170, %p171
      %p173 = scmp.ne.s32.totalorder %s159, %s160
      %p174 = scmp.eq.s32.totalorder %s23, 1
      %p175 = por %p173, %p174
      %p177 = scmp.ne.s32.totalorder %s160, %s176
      %p178 = scmp.eq.s32.totalorder %s23, 0
      %p179 = por %p177, %p178
      %p180 = scmp.le.s32.totalorder 1, %s17
      %p181 = scmp.lt.s32.totalorder %s17, 3
      %p182 = pnand %p180, %p181
      %p183 = pneg %p182
      // Predicated region
      $region9: #{tpu_custom_call.1} parent=5 // pred_check
        _
      $region10: #{tpu_custom_call.1} parent=5 // pred_check_branch
        %185 = sbr.rel (%p182) target = $region12
      $region11: #{tpu_custom_call.1} parent=5 // pred_region
        %s186 = ssub.s32 %s17, 1
        // Predicated region
        $region13: #{tpu_custom_call.1} parent=11 // pred_check
          %p187 = pneg %p90
        $region14: #{tpu_custom_call.1} parent=11 // pred_check_branch
          %189 = sbr.rel (%p187) target = $region16
        $region15: #{tpu_custom_call.1} parent=11 // pred_region
          %s190 = smul.u32 40, %s29
          %p191 = scmp.lt.s32.totalorder %s190, 39
          %s192 = scalar_select %p191, %s190, 39
          %s193 = smul.addr %s192, 8
          %s194 = scalar_lea.vmem %s1, %s193
          %s195 = smul.u32 40, %s29
        $region16: #{tpu_custom_call.1} parent=11 // pred_fallthru
          _
        // Predicated region
        $region17: #{tpu_custom_call.1} parent=11 // pred_check
          %p196 = pneg %p116
        $region18: #{tpu_custom_call.1} parent=11 // pred_check_branch
          %198 = sbr.rel (%p196) target = $region20
        $region19: #{tpu_custom_call.1} parent=11 // pred_region
          %s199 = smul.u32 3, %s29
          %p200 = scmp.lt.s32.totalorder %s199, 2
          %s201 = scalar_select %p200, %s199, 2
          %s202 = smul.addr %s201, 8
          %s203 = scalar_lea.vmem %s2, %s202
          %s204 = smul.u32 3, %s29
        $region20: #{tpu_custom_call.1} parent=11 // pred_fallthru
          _
      $region12: #{tpu_custom_call.1} parent=5 // pred_fallthru
        _
      %p205 = scmp.lt.s32.totalorder %s17, 2
      // Predicated region
      $region21: #{tpu_custom_call.1} parent=5 // pred_check
        %p206 = pneg %p205
      $region22: #{tpu_custom_call.1} parent=5 // pred_check_branch
        %208 = sbr.rel (%p206) target = $region24
      $region23: #{tpu_custom_call.1} parent=5 // pred_region
        // Predicated region
        $region25: #{tpu_custom_call.1} parent=23 // pred_check
          %p209 = pneg %p58
        $region26: #{tpu_custom_call.1} parent=23 // pred_check_branch
          %211 = sbr.rel (%p209) target = $region28
        $region27: #{tpu_custom_call.1} parent=23 // pred_region
          %p212 = scmp.lt.s32.totalorder %s24, 1
          %s213 = scalar_select %p212, %s24, 1
          %p214 = scmp.lt.s32.totalorder %s25, 0
          %s215 = scalar_select %p214, %s25, 0
          %s216 = smul.addr %s213, 4
          %s217 = sadd.s32 %s215, %s216
          %s218 = smul.addr %s217, 8
          %s219 = scalar_lea.vmem %s0, %s218
        $region28: #{tpu_custom_call.1} parent=23 // pred_fallthru
          _
      $region24: #{tpu_custom_call.1} parent=5 // pred_fallthru
        _
      %p220 = scmp.le.s32.totalorder 1, %s17
      %p221 = scmp.lt.s32.totalorder %s17, 3
      %p222 = pnand %p220, %p221
      %p223 = pneg %p222
      // Predicated region
      $region29: #{tpu_custom_call.1} parent=5 // pred_check
        _
      $region30: #{tpu_custom_call.1} parent=5 // pred_check_branch
        %225 = sbr.rel (%p222) target = $region32
      $region31: #{tpu_custom_call.1} parent=5 // pred_region
        %s226 = ssub.s32 %s17, 1
        %p227 = scmp.lt.s32.totalorder %s27, 1
        %s228 = scalar_select %p227, %s27, 1
        %p229 = scmp.lt.s32.totalorder %s28, 0
        %s230 = scalar_select %p229, %s28, 0
        %s231 = smul.addr %s228, 4
        %s232 = sadd.s32 %s230, %s231
        %s233 = smul.addr %s232, 8
        %s234 = scalar_lea.vmem %s0, %s233
        %p235 = pneg %p64
        %p236 = pneg %p61
        %s237 = smul.u32 40, %s29
        %p238 = scmp.lt.s32.totalorder %s237, 39
        %s239 = scalar_select %p238, %s237, 39
        %s240 = smul.addr %s239, 8
        %s241 = scalar_lea.vmem %s1, %s240
        %p242 = pneg %p90
        %p243 = pneg %p87
        %s244 = smul.u32 3, %s29
        %p245 = scmp.lt.s32.totalorder %s244, 2
        %s246 = scalar_select %p245, %s244, 2
        %s247 = smul.addr %s246, 8
        %s248 = scalar_lea.vmem %s2, %s247
        %p249 = pneg %p116
        %p250 = pneg %p113
        %p251 = pneg %p144
        %p252 = pneg %p141
        %s253 = sand.u32 %s131, 1
        %s254 = scalar_lea.sflag [#allocation7], %s253
        %s255 = sand.u32 %s131, 1
        %s256 = smul.addr %s255, 32
        %s257 = scalar_lea.vmem [#allocation6], %s256
        %p258 = pneg %p172
        %p259 = pneg %p169
        %s260 = sand.u32 %s159, 1
        %s261 = scalar_lea.sflag [#allocation9], %s260
        %s262 = sand.u32 %s159, 1
        %s263 = scalar_lea.vmem [#allocation8], %s262
        %p264 = scmp.lt.s32.totalorder %s27, 1
        %s265 = scalar_select %p264, %s27, 1
        %p266 = scmp.lt.s32.totalorder %s28, 0
        %s267 = scalar_select %p266, %s28, 0
        %s268 = smul.addr %s265, 4
        %s269 = sadd.s32 %s267, %s268
        %s270 = smul.addr %s269, 8
        %s271 = scalar_lea.vmem %s0, %s270
        %s272 = smul.u32 40, %s29
        %p273 = scmp.lt.s32.totalorder %s272, 39
        %s274 = scalar_select %p273, %s272, 39
        %s275 = smul.addr %s274, 8
        %s276 = scalar_lea.vmem %s1, %s275
        %s277 = smul.u32 40, %s29
        %s278 = smul.u32 3, %s29
        %p279 = scmp.lt.s32.totalorder %s278, 2
        %s280 = scalar_select %p279, %s278, 2
        %s281 = smul.addr %s280, 8
        %s282 = scalar_lea.vmem %s2, %s281
        %s283 = smul.u32 3, %s29
        %p284 = scmp.eq.s32.totalorder %s29, 0
        // Predicated region
        $region33: #{tpu_custom_call.1} parent=31 // pred_check
          %p285 = pneg %p284
        $region34: #{tpu_custom_call.1} parent=31 // pred_check_branch
          %287 = sbr.rel (%p285) target = $region36
        $region35: #{tpu_custom_call.1} parent=31 // pred_region
          %v288 = vld [vmem:[%s271] sm:$0xff]
          %v289 = vld [vmem:[%s271 + $0x8] sm:$0xff]
          %v290 = vld [vmem:[%s271 + $0x10] sm:$0xff]
          %v291 = vld [vmem:[%s271 + $0x18] sm:$0xff]
          %v292 = vmul.f32 %v288, %v288
          %v293 = vmul.f32 %v289, %v289
          %v294 = vmul.f32 %v290, %v290
          %v295 = vmul.f32 %v291, %v291
          %vm296 = vcmask 523264
          %v297 = vsel %vm296, %v292, 0.0
          %v298 = vsel %vm296, %v293, 0.0
          %v299 = vadd.f32 %v297, %v298
          %v300 = vsel %vm296, %v294, 0.0
          %v301 = vadd.f32 %v299, %v300
          %v302 = vsel %vm296, %v295, 0.0
          %v303 = vadd.f32 %v301, %v302
          %v304 = vrot.slane %v303, 4
          %v305 = vadd.f32 %v303, %v304
          %v306 = vrot.slane %v305, 2
          %v307 = vadd.f32 %v305, %v306
          %v308 = vrot.slane %v307, 1
          %v309 = vadd.f32 %v307, %v308
          %v310 = vmax.f32 %v309, 1e-24
          %v311 = vrsqrt.pop %v310
          %v312 = vmul.f32 %v288, %v311
          %v313 = vmul.f32 %v289, %v311
          %v314 = vmul.f32 %v290, %v311
          %v315 = vmul.f32 %v291, %v311
          %316 = vst.msk [vmem:[#allocation2] sm:$0xff] %vm296, %v312
          %317 = vst.msk [vmem:[#allocation2 + $0x8] sm:$0xff] %vm296, %v313
          %318 = vst.msk [vmem:[#allocation2 + $0x10] sm:$0xff] %vm296, %v314
          %319 = vst.msk [vmem:[#allocation2 + $0x18] sm:$0xff] %vm296, %v315
          %vm320 = vcmask 516096
          %321 = vst.msk [vmem:[#allocation3] sm:$0x1] %vm320, -inf
          %322 = vst.msk [vmem:[#allocation4] sm:$0x1] %vm320, 0
          %323 = vst.msk [vmem:[#allocation5] sm:$0xff] %vm296, 0.0
          %324 = vst.msk [vmem:[#allocation5 + $0x8] sm:$0xff] %vm296, 0.0
          %325 = vst.msk [vmem:[#allocation5 + $0x10] sm:$0xff] %vm296, 0.0
          %326 = vst.msk [vmem:[#allocation5 + $0x18] sm:$0xff] %vm296, 0.0
        $region36: #{tpu_custom_call.1} parent=31 // pred_fallthru
          _
        %v327 = vld [vmem:[#allocation2] sm:$0xff]
        %v328 = vld [vmem:[#allocation2 + $0x8] sm:$0xff]
        %v329 = vld [vmem:[#allocation2 + $0x10] sm:$0xff]
        %v330 = vld [vmem:[#allocation2 + $0x18] sm:$0xff]
        %v331 = vld [vmem:[%s276] sm:$0xff]
        %v332 = vld [vmem:[%s276 + $0x8] sm:$0xff]
        %v333 = vld [vmem:[%s276 + $0x10] sm:$0xff]
        %v334 = vld [vmem:[%s276 + $0x18] sm:$0xff]
        %v335 = vld [vmem:[%s276 + $0x20] sm:$0xff]
        %v336 = vld [vmem:[%s276 + $0x28] sm:$0xff]
        %v337 = vld [vmem:[%s276 + $0x30] sm:$0xff]
        %v338 = vld [vmem:[%s276 + $0x38] sm:$0xff]
        %v339 = vld [vmem:[%s276 + $0x40] sm:$0xff]
        %v340 = vld [vmem:[%s276 + $0x48] sm:$0xff]
        %v341 = vld [vmem:[%s276 + $0x50] sm:$0xff]
        %v342 = vld [vmem:[%s276 + $0x58] sm:$0xff]
        %v343 = vld [vmem:[%s276 + $0x60] sm:$0xff]
        %v344 = vld [vmem:[%s276 + $0x68] sm:$0xff]
        %v345 = vld [vmem:[%s276 + $0x70] sm:$0xff]
        %v346 = vld [vmem:[%s276 + $0x78] sm:$0xff]
        %v347 = vld [vmem:[%s276 + $0x80] sm:$0xff]
        %v348 = vld [vmem:[%s276 + $0x88] sm:$0xff]
        %v349 = vld [vmem:[%s276 + $0x90] sm:$0xff]
        %v350 = vld [vmem:[%s276 + $0x98] sm:$0xff]
        %v351 = vld [vmem:[%s276 + $0xa0] sm:$0xff]
        %v352 = vld [vmem:[%s276 + $0xa8] sm:$0xff]
        %v353 = vld [vmem:[%s276 + $0xb0] sm:$0xff]
        %v354 = vld [vmem:[%s276 + $0xb8] sm:$0xff]
        %v355 = vld [vmem:[%s276 + $0xc0] sm:$0xff]
        %v356 = vld [vmem:[%s276 + $0xc8] sm:$0xff]
        %v357 = vld [vmem:[%s276 + $0xd0] sm:$0xff]
        %v358 = vld [vmem:[%s276 + $0xd8] sm:$0xff]
        %v359 = vld [vmem:[%s276 + $0xe0] sm:$0xff]
        %v360 = vld [vmem:[%s276 + $0xe8] sm:$0xff]
        %v361 = vld [vmem:[%s276 + $0xf0] sm:$0xff]
        %v362 = vld [vmem:[%s276 + $0xf8] sm:$0xff]
        %v363 = vld [vmem:[%s276 + $0x100] sm:$0xff]
        %v364 = vld [vmem:[%s276 + $0x108] sm:$0xff]
        %v365 = vld [vmem:[%s276 + $0x110] sm:$0xff]
        %v366 = vld [vmem:[%s276 + $0x118] sm:$0xff]
        %v367 = vld [vmem:[%s276 + $0x120] sm:$0xff]
        %v368 = vld [vmem:[%s276 + $0x128] sm:$0xff]
        %v369 = vld [vmem:[%s276 + $0x130] sm:$0xff]
        %v370 = vld [vmem:[%s276 + $0x138] sm:$0xff]
        %vm371 = vcmask 261120
        %v373 = vsel %vm371, %v331, 0
        %v376 = vsel %vm371, %v332, 0
        %v379 = vsel %vm371, %v333, 0
        %v382 = vsel %vm371, %v334, 0
        %v385 = vsel %vm371, %v335, 0
        %v388 = vsel %vm371, %v336, 0
        %v391 = vsel %vm371, %v337, 0
        %v394 = vsel %vm371, %v338, 0
        %v397 = vsel %vm371, %v339, 0
        %v400 = vsel %vm371, %v340, 0
        %v403 = vsel %vm371, %v341, 0
        %v406 = vsel %vm371, %v342, 0
        %v409 = vsel %vm371, %v343, 0
        %v412 = vsel %vm371, %v344, 0
        %v415 = vsel %vm371, %v345, 0
        %v418 = vsel %vm371, %v346, 0
        %v421 = vsel %vm371, %v347, 0
        %v424 = vsel %vm371, %v348, 0
        %v427 = vsel %vm371, %v349, 0
        %v430 = vsel %vm371, %v350, 0
        %v433 = vsel %vm371, %v351, 0
        %v436 = vsel %vm371, %v352, 0
        %v439 = vsel %vm371, %v353, 0
        %v442 = vsel %vm371, %v354, 0
        %v445 = vsel %vm371, %v355, 0
        %v448 = vsel %vm371, %v356, 0
        %v451 = vsel %vm371, %v357, 0
        %v454 = vsel %vm371, %v358, 0
        %v457 = vsel %vm371, %v359, 0
        %v460 = vsel %vm371, %v360, 0
        %v463 = vsel %vm371, %v361, 0
        %v466 = vsel %vm371, %v362, 0
        %v469 = vsel %vm371, %v363, 0
        %v472 = vsel %vm371, %v364, 0
        %v475 = vsel %vm371, %v365, 0
        %v478 = vsel %vm371, %v366, 0
        %v481 = vsel %vm371, %v367, 0
        %v484 = vsel %vm371, %v368, 0
        %v487 = vsel %vm371, %v369, 0
        %v490 = vsel %vm371, %v370, 0
        %492 = vmatprep.subr.mxu0 0.0
        %493 = vmatpush1.msra.mxu0 %v327
        %494 = vmatprep.subr.mxu0 0.0
        %495 = vmatpush1.msra.mxu0 %v328
        %496 = vmatprep.subr.mxu0 0.0
        %497 = vmatpush1.msra.mxu0 %v329
        %498 = vmatprep.subr.mxu0 0.0
        %499 = vmatpush1.msra.mxu0 %v330
        %500 = vmatprep.subr.mxu0 0.0
        %501 = vmatpush1.msra.mxu0 0.0
        %502 = vmatprep.subr.mxu0 0.0
        %503 = vmatpush1.msra.mxu0 0.0
        %504 = vmatprep.subr.mxu0 0.0
        %505 = vmatpush1.msra.mxu0 0.0
        %506 = vmatprep.subr.mxu0 0.0
        %507 = vmatpush1.msra.mxu0 0.0
        %508 = vmatprep.subr.mxu0 0.0
        %509 = vmatpush1.msra.mxu0 0.0
        %510 = vmatprep.subr.mxu0 0.0
        %511 = vmatpush1.msra.mxu0 0.0
        %512 = vmatprep.subr.mxu0 0.0
        %513 = vmatpush1.msra.mxu0 0.0
        %514 = vmatprep.subr.mxu0 0.0
        %515 = vmatpush1.msra.mxu0 0.0
        %516 = vmatprep.subr.mxu0 0.0
        %517 = vmatpush1.msra.mxu0 0.0
        %518 = vmatprep.subr.mxu0 0.0
        %519 = vmatpush1.msra.mxu0 0.0
        %520 = vmatprep.subr.mxu0 0.0
        %521 = vmatpush1.msra.mxu0 0.0
        %522 = vmatprep.subr.mxu0 0.0
        %523 = vmatpush1.msra.mxu0 0.0
        %524 = vmatprep.subr.mxu0 0.0
        %525 = vmatpush1.msra.mxu0 0.0
        %526 = vmatprep.subr.mxu0 0.0
        %527 = vmatpush1.msra.mxu0 0.0
        %528 = vmatprep.subr.mxu0 0.0
        %529 = vmatpush1.msra.mxu0 0.0
        %530 = vmatprep.subr.mxu0 0.0
        %531 = vmatpush1.msra.mxu0 0.0
        %532 = vmatprep.subr.mxu0 0.0
        %533 = vmatpush1.msra.mxu0 0.0
        %534 = vmatprep.subr.mxu0 0.0
        %535 = vmatpush1.msra.mxu0 0.0
        %536 = vmatprep.subr.mxu0 0.0
        %537 = vmatpush1.msra.mxu0 0.0
        %538 = vmatprep.subr.mxu0 0.0
        %539 = vmatpush1.msra.mxu0 0.0
        %540 = vmatprep.subr.mxu0 0.0
        %541 = vmatpush1.msra.mxu0 0.0
        %542 = vmatprep.subr.mxu0 0.0
        %543 = vmatpush1.msra.mxu0 0.0
        %544 = vmatprep.subr.mxu0 0.0
        %545 = vmatpush1.msra.mxu0 0.0
        %546 = vmatprep.subr.mxu0 0.0
        %547 = vmatpush1.msra.mxu0 0.0
        %548 = vmatprep.subr.mxu0 0.0
        %549 = vmatpush1.msra.mxu0 0.0
        %550 = vmatprep.subr.mxu0 0.0
        %551 = vmatpush1.msra.mxu0 0.0
        %552 = vmatprep.subr.mxu0 0.0
        %553 = vmatpush1.msra.mxu0 0.0
        %554 = vmatprep.subr.mxu0 0.0
        %555 = vmatpush1.msra.mxu0 0.0
        %556 = vmatprep.mubr.f32.mxu0 0.0
        %557 = vmatmul.mubr.f32.gmra.mrb[0].mxu0 %v373
        %v558 = vpop.f32.mrb[0].mxu0
        %v559 = vadd.f32 0.0, %v558
        %v560 = vpop.f32.mrb[0].mxu0
        %561 = vmatprep.mubr.f32.mxu0 0.0
        %562 = vmatmul.mubr.f32.gmra.mrb[0].mxu0 %v376
        %v563 = vpop.f32.mrb[0].mxu0
        %v564 = vadd.f32 0.0, %v563
        %v565 = vpop.f32.mrb[0].mxu0
        %566 = vmatprep.mubr.f32.mxu0 0.0
        %567 = vmatmul.mubr.f32.gmra.mrb[0].mxu0 %v379
        %v568 = vpop.f32.mrb[0].mxu0
        %v569 = vadd.f32 0.0, %v568
        %v570 = vpop.f32.mrb[0].mxu0
        %571 = vmatprep.mubr.f32.mxu0 0.0
        %572 = vmatmul.mubr.f32.gmra.mrb[0].mxu0 %v382
        %v573 = vpop.f32.mrb[0].mxu0
        %v574 = vadd.f32 0.0, %v573
        %v575 = vpop.f32.mrb[0].mxu0
        %576 = vmatprep.mubr.f32.mxu0 0.0
        %577 = vmatmul.mubr.f32.gmra.mrb[0].mxu0 %v385
        %v578 = vpop.f32.mrb[0].mxu0
        %v579 = vadd.f32 0.0, %v578
        %v580 = vpop.f32.mrb[0].mxu0
        %581 = vmatprep.mubr.f32.mxu0 0.0
        %582 = vmatmul.mubr.f32.gmra.mrb[0].mxu0 %v388
        %v583 = vpop.f32.mrb[0].mxu0
        %v584 = vadd.f32 0.0, %v583
        %v585 = vpop.f32.mrb[0].mxu0
        %586 = vmatprep.mubr.f32.mxu0 0.0
        %587 = vmatmul.mubr.f32.gmra.mrb[0].mxu0 %v391
        %v588 = vpop.f32.mrb[0].mxu0
        %v589 = vadd.f32 0.0, %v588
        %v590 = vpop.f32.mrb[0].mxu0
        %591 = vmatprep.mubr.f32.mxu0 0.0
        %592 = vmatmul.mubr.f32.gmra.mrb[0].mxu0 %v394
        %v593 = vpop.f32.mrb[0].mxu0
        %v594 = vadd.f32 0.0, %v593
        %v595 = vpop.f32.mrb[0].mxu0
        %596 = vmatprep.mubr.f32.mxu0 0.0
        %597 = vmatmul.mubr.f32.gmra.mrb[0].mxu0 %v397
        %v598 = vpop.f32.mrb[0].mxu0
        %v599 = vadd.f32 0.0, %v598
        %v600 = vpop.f32.mrb[0].mxu0
        %601 = vmatprep.mubr.f32.mxu0 0.0
        %602 = vmatmul.mubr.f32.gmra.mrb[0].mxu0 %v400
        %v603 = vpop.f32.mrb[0].mxu0
        %v604 = vadd.f32 0.0, %v603
        %v605 = vpop.f32.mrb[0].mxu0
        %606 = vmatprep.mubr.f32.mxu0 0.0
        %607 = vmatmul.mubr.f32.gmra.mrb[0].mxu0 %v403
        %v608 = vpop.f32.mrb[0].mxu0
        %v609 = vadd.f32 0.0, %v608
        %v610 = vpop.f32.mrb[0].mxu0
        %611 = vmatprep.mubr.f32.mxu0 0.0
        %612 = vmatmul.mubr.f32.gmra.mrb[0].mxu0 %v406
        %v613 = vpop.f32.mrb[0].mxu0
        %v614 = vadd.f32 0.0, %v613
        %v615 = vpop.f32.mrb[0].mxu0
        %616 = vmatprep.mubr.f32.mxu0 0.0
        %617 = vmatmul.mubr.f32.gmra.mrb[0].mxu0 %v409
        %v618 = vpop.f32.mrb[0].mxu0
        %v619 = vadd.f32 0.0, %v618
        %v620 = vpop.f32.mrb[0].mxu0
        %621 = vmatprep.mubr.f32.mxu0 0.0
        %622 = vmatmul.mubr.f32.gmra.mrb[0].mxu0 %v412
        %v623 = vpop.f32.mrb[0].mxu0
        %v624 = vadd.f32 0.0, %v623
        %v625 = vpop.f32.mrb[0].mxu0
        %626 = vmatprep.mubr.f32.mxu0 0.0
        %627 = vmatmul.mubr.f32.gmra.mrb[0].mxu0 %v415
        %v628 = vpop.f32.mrb[0].mxu0
        %v629 = vadd.f32 0.0, %v628
        %v630 = vpop.f32.mrb[0].mxu0
        %631 = vmatprep.mubr.f32.mxu0 0.0
        %632 = vmatmul.mubr.f32.gmra.mrb[0].mxu0 %v418
        %v633 = vpop.f32.mrb[0].mxu0
        %v634 = vadd.f32 0.0, %v633
        %v635 = vpop.f32.mrb[0].mxu0
        %636 = vmatprep.mubr.f32.mxu0 0.0
        %637 = vmatmul.mubr.f32.gmra.mrb[0].mxu0 %v421
        %v638 = vpop.f32.mrb[0].mxu0
        %v639 = vadd.f32 0.0, %v638
        %v640 = vpop.f32.mrb[0].mxu0
        %641 = vmatprep.mubr.f32.mxu0 0.0
        %642 = vmatmul.mubr.f32.gmra.mrb[0].mxu0 %v424
        %v643 = vpop.f32.mrb[0].mxu0
        %v644 = vadd.f32 0.0, %v643
        %v645 = vpop.f32.mrb[0].mxu0
        %646 = vmatprep.mubr.f32.mxu0 0.0
        %647 = vmatmul.mubr.f32.gmra.mrb[0].mxu0 %v427
        %v648 = vpop.f32.mrb[0].mxu0
        %v649 = vadd.f32 0.0, %v648
        %v650 = vpop.f32.mrb[0].mxu0
        %651 = vmatprep.mubr.f32.mxu0 0.0
        %652 = vmatmul.mubr.f32.gmra.mrb[0].mxu0 %v430
        %v653 = vpop.f32.mrb[0].mxu0
        %v654 = vadd.f32 0.0, %v653
        %v655 = vpop.f32.mrb[0].mxu0
        %656 = vmatprep.mubr.f32.mxu0 0.0
        %657 = vmatmul.mubr.f32.gmra.mrb[0].mxu0 %v433
        %v658 = vpop.f32.mrb[0].mxu0
        %v659 = vadd.f32 0.0, %v658
        %v660 = vpop.f32.mrb[0].mxu0
        %661 = vmatprep.mubr.f32.mxu0 0.0
        %662 = vmatmul.mubr.f32.gmra.mrb[0].mxu0 %v436
        %v663 = vpop.f32.mrb[0].mxu0
        %v664 = vadd.f32 0.0, %v663
        %v665 = vpop.f32.mrb[0].mxu0
        %666 = vmatprep.mubr.f32.mxu0 0.0
        %667 = vmatmul.mubr.f32.gmra.mrb[0].mxu0 %v439
        %v668 = vpop.f32.mrb[0].mxu0
        %v669 = vadd.f32 0.0, %v668
        %v670 = vpop.f32.mrb[0].mxu0
        %671 = vmatprep.mubr.f32.mxu0 0.0
        %672 = vmatmul.mubr.f32.gmra.mrb[0].mxu0 %v442
        %v673 = vpop.f32.mrb[0].mxu0
        %v674 = vadd.f32 0.0, %v673
        %v675 = vpop.f32.mrb[0].mxu0
        %676 = vmatprep.mubr.f32.mxu0 0.0
        %677 = vmatmul.mubr.f32.gmra.mrb[0].mxu0 %v445
        %v678 = vpop.f32.mrb[0].mxu0
        %v679 = vadd.f32 0.0, %v678
        %v680 = vpop.f32.mrb[0].mxu0
        %681 = vmatprep.mubr.f32.mxu0 0.0
        %682 = vmatmul.mubr.f32.gmra.mrb[0].mxu0 %v448
        %v683 = vpop.f32.mrb[0].mxu0
        %v684 = vadd.f32 0.0, %v683
        %v685 = vpop.f32.mrb[0].mxu0
        %686 = vmatprep.mubr.f32.mxu0 0.0
        %687 = vmatmul.mubr.f32.gmra.mrb[0].mxu0 %v451
        %v688 = vpop.f32.mrb[0].mxu0
        %v689 = vadd.f32 0.0, %v688
        %v690 = vpop.f32.mrb[0].mxu0
        %691 = vmatprep.mubr.f32.mxu0 0.0
        %692 = vmatmul.mubr.f32.gmra.mrb[0].mxu0 %v454
        %v693 = vpop.f32.mrb[0].mxu0
        %v694 = vadd.f32 0.0, %v693
        %v695 = vpop.f32.mrb[0].mxu0
        %696 = vmatprep.mubr.f32.mxu0 0.0
        %697 = vmatmul.mubr.f32.gmra.mrb[0].mxu0 %v457
        %v698 = vpop.f32.mrb[0].mxu0
        %v699 = vadd.f32 0.0, %v698
        %v700 = vpop.f32.mrb[0].mxu0
        %701 = vmatprep.mubr.f32.mxu0 0.0
        %702 = vmatmul.mubr.f32.gmra.mrb[0].mxu0 %v460
        %v703 = vpop.f32.mrb[0].mxu0
        %v704 = vadd.f32 0.0, %v703
        %v705 = vpop.f32.mrb[0].mxu0
        %706 = vmatprep.mubr.f32.mxu0 0.0
        %707 = vmatmul.mubr.f32.gmra.mrb[0].mxu0 %v463
        %v708 = vpop.f32.mrb[0].mxu0
        %v709 = vadd.f32 0.0, %v708
        %v710 = vpop.f32.mrb[0].mxu0
        %711 = vmatprep.mubr.f32.mxu0 0.0
        %712 = vmatmul.mubr.f32.gmra.mrb[0].mxu0 %v466
        %v713 = vpop.f32.mrb[0].mxu0
        %v714 = vadd.f32 0.0, %v713
        %v715 = vpop.f32.mrb[0].mxu0
        %716 = vmatprep.mubr.f32.mxu0 0.0
        %717 = vmatmul.mubr.f32.gmra.mrb[0].mxu0 %v469
        %v718 = vpop.f32.mrb[0].mxu0
        %v719 = vadd.f32 0.0, %v718
        %v720 = vpop.f32.mrb[0].mxu0
        %721 = vmatprep.mubr.f32.mxu0 0.0
        %722 = vmatmul.mubr.f32.gmra.mrb[0].mxu0 %v472
        %v723 = vpop.f32.mrb[0].mxu0
        %v724 = vadd.f32 0.0, %v723
        %v725 = vpop.f32.mrb[0].mxu0
        %726 = vmatprep.mubr.f32.mxu0 0.0
        %727 = vmatmul.mubr.f32.gmra.mrb[0].mxu0 %v475
        %v728 = vpop.f32.mrb[0].mxu0
        %v729 = vadd.f32 0.0, %v728
        %v730 = vpop.f32.mrb[0].mxu0
        %731 = vmatprep.mubr.f32.mxu0 0.0
        %732 = vmatmul.mubr.f32.gmra.mrb[0].mxu0 %v478
        %v733 = vpop.f32.mrb[0].mxu0
        %v734 = vadd.f32 0.0, %v733
        %v735 = vpop.f32.mrb[0].mxu0
        %736 = vmatprep.mubr.f32.mxu0 0.0
        %737 = vmatmul.mubr.f32.gmra.mrb[0].mxu0 %v481
        %v738 = vpop.f32.mrb[0].mxu0
        %v739 = vadd.f32 0.0, %v738
        %v740 = vpop.f32.mrb[0].mxu0
        %741 = vmatprep.mubr.f32.mxu0 0.0
        %742 = vmatmul.mubr.f32.gmra.mrb[0].mxu0 %v484
        %v743 = vpop.f32.mrb[0].mxu0
        %v744 = vadd.f32 0.0, %v743
        %v745 = vpop.f32.mrb[0].mxu0
        %746 = vmatprep.mubr.f32.mxu0 0.0
        %747 = vmatmul.mubr.f32.gmra.mrb[0].mxu0 %v487
        %v748 = vpop.f32.mrb[0].mxu0
        %v749 = vadd.f32 0.0, %v748
        %v750 = vpop.f32.mrb[0].mxu0
        %751 = vmatprep.mubr.f32.mxu0 0.0
        %752 = vmatmul.mubr.f32.gmra.mrb[0].mxu0 %v490
        %v753 = vpop.f32.mrb[0].mxu0
        %v754 = vadd.f32 0.0, %v753
        %v755 = vpop.f32.mrb[0].mxu0
        %756 = vdwg.mxu0
        %v757 = vlaneseq
        %v758 = vshrl.u32 %v757, 7
        %v759 = vadd.s32 %v758, 8
        %v760 = vadd.s32 %v758, 16
        %v761 = vadd.s32 %v758, 24
        %v762 = vadd.s32 %v758, 32
        %v763 = vadd.s32 %v758, 40
        %v764 = vadd.s32 %v758, 48
        %v765 = vadd.s32 %v758, 56
        %v766 = vadd.s32 %v758, 64
        %v767 = vadd.s32 %v758, 72
        %v768 = vadd.s32 %v758, 80
        %v769 = vadd.s32 %v758, 88
        %v770 = vadd.s32 %v758, 96
        %v771 = vadd.s32 %v758, 104
        %v772 = vadd.s32 %v758, 112
        %v773 = vadd.s32 %v758, 120
        %v774 = vadd.s32 %v758, 128
        %v775 = vadd.s32 %v758, 136
        %v776 = vadd.s32 %v758, 144
        %v777 = vadd.s32 %v758, 152
        %v778 = vadd.s32 %v758, 160
        %v779 = vadd.s32 %v758, 168
        %v780 = vadd.s32 %v758, 176
        %v781 = vadd.s32 %v758, 184
        %v782 = vadd.s32 %v758, 192
        %v783 = vadd.s32 %v758, 200
        %v784 = vadd.s32 %v758, 208
        %v785 = vadd.s32 %v758, 216
        %v786 = vadd.s32 %v758, 224
        %v787 = vadd.s32 %v758, 232
        %v788 = vadd.s32 %v758, 240
        %v789 = vadd.s32 %v758, 248
        %v790 = vadd.s32 %v758, 256
        %v791 = vadd.s32 %v758, 264
        %v792 = vadd.s32 %v758, 272
        %v793 = vadd.s32 %v758, 280
        %v794 = vadd.s32 %v758, 288
        %v795 = vadd.s32 %v758, 296
        %v796 = vadd.s32 %v758, 304
        %v797 = vadd.s32 %v758, 312
        %vm798 = vcmask 523264
        %v799 = vsel %vm798, %v559, -inf
        %v800 = vsel %vm798, %v564, -inf
        %v801 = vsel %vm798, %v569, -inf
        %v802 = vsel %vm798, %v574, -inf
        %v803 = vsel %vm798, %v579, -inf
        %v804 = vmax.f32 %v799, %v803
        %v805 = vsel %vm798, %v584, -inf
        %v806 = vmax.f32 %v800, %v805
        %v807 = vsel %vm798, %v589, -inf
        %v808 = vmax.f32 %v801, %v807
        %v809 = vsel %vm798, %v594, -inf
        %v810 = vmax.f32 %v802, %v809
        %v811 = vsel %vm798, %v599, -inf
        %v812 = vmax.f32 %v804, %v811
        %v813 = vsel %vm798, %v604, -inf
        %v814 = vmax.f32 %v806, %v813
        %v815 = vsel %vm798, %v609, -inf
        %v816 = vmax.f32 %v808, %v815
        %v817 = vsel %vm798, %v614, -inf
        %v818 = vmax.f32 %v810, %v817
        %v819 = vsel %vm798, %v619, -inf
        %v820 = vmax.f32 %v812, %v819
        %v821 = vsel %vm798, %v624, -inf
        %v822 = vmax.f32 %v814, %v821
        %v823 = vsel %vm798, %v629, -inf
        %v824 = vmax.f32 %v816, %v823
        %v825 = vsel %vm798, %v634, -inf
        %v826 = vmax.f32 %v818, %v825
        %v827 = vsel %vm798, %v639, -inf
        %v828 = vmax.f32 %v820, %v827
        %v829 = vsel %vm798, %v644, -inf
        %v830 = vmax.f32 %v822, %v829
        %v831 = vsel %vm798, %v649, -inf
        %v832 = vmax.f32 %v824, %v831
        %v833 = vsel %vm798, %v654, -inf
        %v834 = vmax.f32 %v826, %v833
        %v835 = vsel %vm798, %v659, -inf
        %v836 = vmax.f32 %v828, %v835
        %v837 = vsel %vm798, %v664, -inf
        %v838 = vmax.f32 %v830, %v837
        %v839 = vsel %vm798, %v669, -inf
        %v840 = vmax.f32 %v832, %v839
        %v841 = vsel %vm798, %v674, -inf
        %v842 = vmax.f32 %v834, %v841
        %v843 = vsel %vm798, %v679, -inf
        %v844 = vmax.f32 %v836, %v843
        %v845 = vsel %vm798, %v684, -inf
        %v846 = vmax.f32 %v838, %v845
        %v847 = vsel %vm798, %v689, -inf
        %v848 = vmax.f32 %v840, %v847
        %v849 = vsel %vm798, %v694, -inf
        %v850 = vmax.f32 %v842, %v849
        %v851 = vsel %vm798, %v699, -inf
        %v852 = vmax.f32 %v844, %v851
        %v853 = vsel %vm798, %v704, -inf
        %v854 = vmax.f32 %v846, %v853
        %v855 = vsel %vm798, %v709, -inf
        %v856 = vmax.f32 %v848, %v855
        %v857 = vsel %vm798, %v714, -inf
        %v858 = vmax.f32 %v850, %v857
        %v859 = vsel %vm798, %v719, -inf
        %v860 = vmax.f32 %v852, %v859
        %v861 = vsel %vm798, %v724, -inf
        %v862 = vmax.f32 %v854, %v861
        %v863 = vsel %vm798, %v729, -inf
        %v864 = vmax.f32 %v856, %v863
        %v865 = vsel %vm798, %v734, -inf
        %v866 = vmax.f32 %v858, %v865
        %v867 = vsel %vm798, %v739, -inf
        %v868 = vmax.f32 %v860, %v867
        %v869 = vsel %vm798, %v744, -inf
        %v870 = vmax.f32 %v862, %v869
        %v871 = vsel %vm798, %v749, -inf
        %v872 = vmax.f32 %v864, %v871
        %v873 = vsel %vm798, %v754, -inf
        %v874 = vmax.f32 %v866, %v873
        %v875 = vmax.f32 %v868, %v870
        %v876 = vmax.f32 %v872, %v874
        %v877 = vmax.f32 %v875, %v876
        %v878 = vrot.slane %v877, 4
        %v879 = vmax.f32 %v877, %v878
        %v880 = vrot.slane %v879, 2
        %v881 = vmax.f32 %v879, %v880
        %v882 = vrot.slane %v881, 1
        %v883 = vmax.f32 %v881, %v882
        %vm884 = vcmp.eq.f32.partialorder %v559, %v883
        %vm885 = vcmp.eq.f32.partialorder %v564, %v883
        %vm886 = vcmp.eq.f32.partialorder %v569, %v883
        %vm887 = vcmp.eq.f32.partialorder %v574, %v883
        %vm888 = vcmp.eq.f32.partialorder %v579, %v883
        %vm889 = vcmp.eq.f32.partialorder %v584, %v883
        %vm890 = vcmp.eq.f32.partialorder %v589, %v883
        %vm891 = vcmp.eq.f32.partialorder %v594, %v883
        %vm892 = vcmp.eq.f32.partialorder %v599, %v883
        %vm893 = vcmp.eq.f32.partialorder %v604, %v883
        %vm894 = vcmp.eq.f32.partialorder %v609, %v883
        %vm895 = vcmp.eq.f32.partialorder %v614, %v883
        %vm896 = vcmp.eq.f32.partialorder %v619, %v883
        %vm897 = vcmp.eq.f32.partialorder %v624, %v883
        %vm898 = vcmp.eq.f32.partialorder %v629, %v883
        %vm899 = vcmp.eq.f32.partialorder %v634, %v883
        %vm900 = vcmp.eq.f32.partialorder %v639, %v883
        %vm901 = vcmp.eq.f32.partialorder %v644, %v883
        %vm902 = vcmp.eq.f32.partialorder %v649, %v883
        %vm903 = vcmp.eq.f32.partialorder %v654, %v883
        %vm904 = vcmp.eq.f32.partialorder %v659, %v883
        %vm905 = vcmp.eq.f32.partialorder %v664, %v883
        %vm906 = vcmp.eq.f32.partialorder %v669, %v883
        %vm907 = vcmp.eq.f32.partialorder %v674, %v883
        %vm908 = vcmp.eq.f32.partialorder %v679, %v883
        %vm909 = vcmp.eq.f32.partialorder %v684, %v883
        %vm910 = vcmp.eq.f32.partialorder %v689, %v883
        %vm911 = vcmp.eq.f32.partialorder %v694, %v883
        %vm912 = vcmp.eq.f32.partialorder %v699, %v883
        %vm913 = vcmp.eq.f32.partialorder %v704, %v883
        %vm914 = vcmp.eq.f32.partialorder %v709, %v883
        %vm915 = vcmp.eq.f32.partialorder %v714, %v883
        %vm916 = vcmp.eq.f32.partialorder %v719, %v883
        %vm917 = vcmp.eq.f32.partialorder %v724, %v883
        %vm918 = vcmp.eq.f32.partialorder %v729, %v883
        %vm919 = vcmp.eq.f32.partialorder %v734, %v883
        %vm920 = vcmp.eq.f32.partialorder %v739, %v883
        %vm921 = vcmp.eq.f32.partialorder %v744, %v883
        %vm922 = vcmp.eq.f32.partialorder %v749, %v883
        %vm923 = vcmp.eq.f32.partialorder %v754, %v883
        %v924 = vsel %vm884, %v758, 320
        %v925 = vsel %vm885, %v759, 320
        %v926 = vsel %vm886, %v760, 320
        %v927 = vsel %vm887, %v761, 320
        %v928 = vsel %vm888, %v762, 320
        %v929 = vsel %vm889, %v763, 320
        %v930 = vsel %vm890, %v764, 320
        %v931 = vsel %vm891, %v765, 320
        %v932 = vsel %vm892, %v766, 320
        %v933 = vsel %vm893, %v767, 320
        %v934 = vsel %vm894, %v768, 320
        %v935 = vsel %vm895, %v769, 320
        %v936 = vsel %vm896, %v770, 320
        %v937 = vsel %vm897, %v771, 320
        %v938 = vsel %vm898, %v772, 320
        %v939 = vsel %vm899, %v773, 320
        %v940 = vsel %vm900, %v774, 320
        %v941 = vsel %vm901, %v775, 320
        %v942 = vsel %vm902, %v776, 320
        %v943 = vsel %vm903, %v777, 320
        %v944 = vsel %vm904, %v778, 320
        %v945 = vsel %vm905, %v779, 320
        %v946 = vsel %vm906, %v780, 320
        %v947 = vsel %vm907, %v781, 320
        %v948 = vsel %vm908, %v782, 320
        %v949 = vsel %vm909, %v783, 320
        %v950 = vsel %vm910, %v784, 320
        %v951 = vsel %vm911, %v785, 320
        %v952 = vsel %vm912, %v786, 320
        %v953 = vsel %vm913, %v787, 320
        %v954 = vsel %vm914, %v788, 320
        %v955 = vsel %vm915, %v789, 320
        %v956 = vsel %vm916, %v790, 320
        %v957 = vsel %vm917, %v791, 320
        %v958 = vsel %vm918, %v792, 320
        %v959 = vsel %vm919, %v793, 320
        %v960 = vsel %vm920, %v794, 320
        %v961 = vsel %vm921, %v795, 320
        %v962 = vsel %vm922, %v796, 320
        %v963 = vsel %vm923, %v797, 320
        %v964 = vsel %vm798, %v924, 2147483647
        %v965 = vsel %vm798, %v925, 2147483647
        %v966 = vsel %vm798, %v926, 2147483647
        %v967 = vsel %vm798, %v927, 2147483647
        %v968 = vsel %vm798, %v928, 2147483647
        %vm969 = vcmp.lt.s32.totalorder %v964, %v968
        %v970 = vsel %vm969, %v964, %v968
        %v971 = vsel %vm798, %v929, 2147483647
        %vm972 = vcmp.lt.s32.totalorder %v965, %v971
        %v973 = vsel %vm972, %v965, %v971
        %v974 = vsel %vm798, %v930, 2147483647
        %vm975 = vcmp.lt.s32.totalorder %v966, %v974
        %v976 = vsel %vm975, %v966, %v974
        %v977 = vsel %vm798, %v931, 2147483647
        %vm978 = vcmp.lt.s32.totalorder %v967, %v977
        %v979 = vsel %vm978, %v967, %v977
        %v980 = vsel %vm798, %v932, 2147483647
        %vm981 = vcmp.lt.s32.totalorder %v970, %v980
        %v982 = vsel %vm981, %v970, %v980
        %v983 = vsel %vm798, %v933, 2147483647
        %vm984 = vcmp.lt.s32.totalorder %v973, %v983
        %v985 = vsel %vm984, %v973, %v983
        %v986 = vsel %vm798, %v934, 2147483647
        %vm987 = vcmp.lt.s32.totalorder %v976, %v986
        %v988 = vsel %vm987, %v976, %v986
        %v989 = vsel %vm798, %v935, 2147483647
        %vm990 = vcmp.lt.s32.totalorder %v979, %v989
        %v991 = vsel %vm990, %v979, %v989
        %v992 = vsel %vm798, %v936, 2147483647
        %vm993 = vcmp.lt.s32.totalorder %v982, %v992
        %v994 = vsel %vm993, %v982, %v992
        %v995 = vsel %vm798, %v937, 2147483647
        %vm996 = vcmp.lt.s32.totalorder %v985, %v995
        %v997 = vsel %vm996, %v985, %v995
        %v998 = vsel %vm798, %v938, 2147483647
        %vm999 = vcmp.lt.s32.totalorder %v988, %v998
        %v1000 = vsel %vm999, %v988, %v998
        %v1001 = vsel %vm798, %v939, 2147483647
        %vm1002 = vcmp.lt.s32.totalorder %v991, %v1001
        %v1003 = vsel %vm1002, %v991, %v1001
        %v1004 = vsel %vm798, %v940, 2147483647
        %vm1005 = vcmp.lt.s32.totalorder %v994, %v1004
        %v1006 = vsel %vm1005, %v994, %v1004
        %v1007 = vsel %vm798, %v941, 2147483647
        %vm1008 = vcmp.lt.s32.totalorder %v997, %v1007
        %v1009 = vsel %vm1008, %v997, %v1007
        %v1010 = vsel %vm798, %v942, 2147483647
        %vm1011 = vcmp.lt.s32.totalorder %v1000, %v1010
        %v1012 = vsel %vm1011, %v1000, %v1010
        %v1013 = vsel %vm798, %v943, 2147483647
        %vm1014 = vcmp.lt.s32.totalorder %v1003, %v1013
        %v1015 = vsel %vm1014, %v1003, %v1013
        %v1016 = vsel %vm798, %v944, 2147483647
        %vm1017 = vcmp.lt.s32.totalorder %v1006, %v1016
        %v1018 = vsel %vm1017, %v1006, %v1016
        %v1019 = vsel %vm798, %v945, 2147483647
        %vm1020 = vcmp.lt.s32.totalorder %v1009, %v1019
        %v1021 = vsel %vm1020, %v1009, %v1019
        %v1022 = vsel %vm798, %v946, 2147483647
        %vm1023 = vcmp.lt.s32.totalorder %v1012, %v1022
        %v1024 = vsel %vm1023, %v1012, %v1022
        %v1025 = vsel %vm798, %v947, 2147483647
        %vm1026 = vcmp.lt.s32.totalorder %v1015, %v1025
        %v1027 = vsel %vm1026, %v1015, %v1025
        %v1028 = vsel %vm798, %v948, 2147483647
        %vm1029 = vcmp.lt.s32.totalorder %v1018, %v1028
        %v1030 = vsel %vm1029, %v1018, %v1028
        %v1031 = vsel %vm798, %v949, 2147483647
        %vm1032 = vcmp.lt.s32.totalorder %v1021, %v1031
        %v1033 = vsel %vm1032, %v1021, %v1031
        %v1034 = vsel %vm798, %v950, 2147483647
        %vm1035 = vcmp.lt.s32.totalorder %v1024, %v1034
        %v1036 = vsel %vm1035, %v1024, %v1034
        %v1037 = vsel %vm798, %v951, 2147483647
        %vm1038 = vcmp.lt.s32.totalorder %v1027, %v1037
        %v1039 = vsel %vm1038, %v1027, %v1037
        %v1040 = vsel %vm798, %v952, 2147483647
        %vm1041 = vcmp.lt.s32.totalorder %v1030, %v1040
        %v1042 = vsel %vm1041, %v1030, %v1040
        %v1043 = vsel %vm798, %v953, 2147483647
        %vm1044 = vcmp.lt.s32.totalorder %v1033, %v1043
        %v1045 = vsel %vm1044, %v1033, %v1043
        %v1046 = vsel %vm798, %v954, 2147483647
        %vm1047 = vcmp.lt.s32.totalorder %v1036, %v1046
        %v1048 = vsel %vm1047, %v1036, %v1046
        %v1049 = vsel %vm798, %v955, 2147483647
        %vm1050 = vcmp.lt.s32.totalorder %v1039, %v1049
        %v1051 = vsel %vm1050, %v1039, %v1049
        %v1052 = vsel %vm798, %v956, 2147483647
        %vm1053 = vcmp.lt.s32.totalorder %v1042, %v1052
        %v1054 = vsel %vm1053, %v1042, %v1052
        %v1055 = vsel %vm798, %v957, 2147483647
        %vm1056 = vcmp.lt.s32.totalorder %v1045, %v1055
        %v1057 = vsel %vm1056, %v1045, %v1055
        %v1058 = vsel %vm798, %v958, 2147483647
        %vm1059 = vcmp.lt.s32.totalorder %v1048, %v1058
        %v1060 = vsel %vm1059, %v1048, %v1058
        %v1061 = vsel %vm798, %v959, 2147483647
        %vm1062 = vcmp.lt.s32.totalorder %v1051, %v1061
        %v1063 = vsel %vm1062, %v1051, %v1061
        %v1064 = vsel %vm798, %v960, 2147483647
        %vm1065 = vcmp.lt.s32.totalorder %v1054, %v1064
        %v1066 = vsel %vm1065, %v1054, %v1064
        %v1067 = vsel %vm798, %v961, 2147483647
        %vm1068 = vcmp.lt.s32.totalorder %v1057, %v1067
        %v1069 = vsel %vm1068, %v1057, %v1067
        %v1070 = vsel %vm798, %v962, 2147483647
        %vm1071 = vcmp.lt.s32.totalorder %v1060, %v1070
        %v1072 = vsel %vm1071, %v1060, %v1070
        %v1073 = vsel %vm798, %v963, 2147483647
        %vm1074 = vcmp.lt.s32.totalorder %v1063, %v1073
        %v1075 = vsel %vm1074, %v1063, %v1073
        %vm1076 = vcmp.lt.s32.totalorder %v1066, %v1069
        %v1077 = vsel %vm1076, %v1066, %v1069
        %vm1078 = vcmp.lt.s32.totalorder %v1072, %v1075
        %v1079 = vsel %vm1078, %v1072, %v1075
        %vm1080 = vcmp.lt.s32.totalorder %v1077, %v1079
        %v1081 = vsel %vm1080, %v1077, %v1079
        %v1082 = vrot.slane %v1081, 4
        %vm1083 = vcmp.lt.s32.totalorder %v1081, %v1082
        %v1084 = vsel %vm1083, %v1081, %v1082
        %v1085 = vrot.slane %v1084, 2
        %vm1086 = vcmp.lt.s32.totalorder %v1084, %v1085
        %v1087 = vsel %vm1086, %v1084, %v1085
        %v1088 = vrot.slane %v1087, 1
        %vm1089 = vcmp.lt.s32.totalorder %v1087, %v1088
        %v1090 = vsel %vm1089, %v1087, %v1088
        %vm1091 = vcmp.eq.s32.totalorder %v758, %v1090
        %vm1092 = vcmp.eq.s32.totalorder %v759, %v1090
        %vm1093 = vcmp.eq.s32.totalorder %v760, %v1090
        %vm1094 = vcmp.eq.s32.totalorder %v761, %v1090
        %vm1095 = vcmp.eq.s32.totalorder %v762, %v1090
        %vm1096 = vcmp.eq.s32.totalorder %v763, %v1090
        %vm1097 = vcmp.eq.s32.totalorder %v764, %v1090
        %vm1098 = vcmp.eq.s32.totalorder %v765, %v1090
        %vm1099 = vcmp.eq.s32.totalorder %v766, %v1090
        %vm1100 = vcmp.eq.s32.totalorder %v767, %v1090
        %vm1101 = vcmp.eq.s32.totalorder %v768, %v1090
        %vm1102 = vcmp.eq.s32.totalorder %v769, %v1090
        %vm1103 = vcmp.eq.s32.totalorder %v770, %v1090
        %vm1104 = vcmp.eq.s32.totalorder %v771, %v1090
        %vm1105 = vcmp.eq.s32.totalorder %v772, %v1090
        %vm1106 = vcmp.eq.s32.totalorder %v773, %v1090
        %vm1107 = vcmp.eq.s32.totalorder %v774, %v1090
        %vm1108 = vcmp.eq.s32.totalorder %v775, %v1090
        %vm1109 = vcmp.eq.s32.totalorder %v776, %v1090
        %vm1110 = vcmp.eq.s32.totalorder %v777, %v1090
        %vm1111 = vcmp.eq.s32.totalorder %v778, %v1090
        %vm1112 = vcmp.eq.s32.totalorder %v779, %v1090
        %vm1113 = vcmp.eq.s32.totalorder %v780, %v1090
        %vm1114 = vcmp.eq.s32.totalorder %v781, %v1090
        %vm1115 = vcmp.eq.s32.totalorder %v782, %v1090
        %vm1116 = vcmp.eq.s32.totalorder %v783, %v1090
        %vm1117 = vcmp.eq.s32.totalorder %v784, %v1090
        %vm1118 = vcmp.eq.s32.totalorder %v785, %v1090
        %vm1119 = vcmp.eq.s32.totalorder %v786, %v1090
        %vm1120 = vcmp.eq.s32.totalorder %v787, %v1090
        %vm1121 = vcmp.eq.s32.totalorder %v788, %v1090
        %vm1122 = vcmp.eq.s32.totalorder %v789, %v1090
        %vm1123 = vcmp.eq.s32.totalorder %v790, %v1090
        %vm1124 = vcmp.eq.s32.totalorder %v791, %v1090
        %vm1125 = vcmp.eq.s32.totalorder %v792, %v1090
        %vm1126 = vcmp.eq.s32.totalorder %v793, %v1090
        %vm1127 = vcmp.eq.s32.totalorder %v794, %v1090
        %vm1128 = vcmp.eq.s32.totalorder %v795, %v1090
        %vm1129 = vcmp.eq.s32.totalorder %v796, %v1090
        %vm1130 = vcmp.eq.s32.totalorder %v797, %v1090
        %v1131 = vsel %vm1091, 1, 0
        %v1132 = vsel %vm1092, 1, 0
        %v1133 = vsel %vm1093, 1, 0
        %v1134 = vsel %vm1094, 1, 0
        %v1135 = vsel %vm1095, 1, 0
        %v1136 = vsel %vm1096, 1, 0
        %v1137 = vsel %vm1097, 1, 0
        %v1138 = vsel %vm1098, 1, 0
        %v1139 = vsel %vm1099, 1, 0
        %v1140 = vsel %vm1100, 1, 0
        %v1141 = vsel %vm1101, 1, 0
        %v1142 = vsel %vm1102, 1, 0
        %v1143 = vsel %vm1103, 1, 0
        %v1144 = vsel %vm1104, 1, 0
        %v1145 = vsel %vm1105, 1, 0
        %v1146 = vsel %vm1106, 1, 0
        %v1147 = vsel %vm1107, 1, 0
        %v1148 = vsel %vm1108, 1, 0
        %v1149 = vsel %vm1109, 1, 0
        %v1150 = vsel %vm1110, 1, 0
        %v1151 = vsel %vm1111, 1, 0
        %v1152 = vsel %vm1112, 1, 0
        %v1153 = vsel %vm1113, 1, 0
        %v1154 = vsel %vm1114, 1, 0
        %v1155 = vsel %vm1115, 1, 0
        %v1156 = vsel %vm1116, 1, 0
        %v1157 = vsel %vm1117, 1, 0
        %v1158 = vsel %vm1118, 1, 0
        %v1159 = vsel %vm1119, 1, 0
        %v1160 = vsel %vm1120, 1, 0
        %v1161 = vsel %vm1121, 1, 0
        %v1162 = vsel %vm1122, 1, 0
        %v1163 = vsel %vm1123, 1, 0
        %v1164 = vsel %vm1124, 1, 0
        %v1165 = vsel %vm1125, 1, 0
        %v1166 = vsel %vm1126, 1, 0
        %v1167 = vsel %vm1127, 1, 0
        %v1168 = vsel %vm1128, 1, 0
        %v1169 = vsel %vm1129, 1, 0
        %v1170 = vsel %vm1130, 1, 0
        %v1171 = vcvt.s32.f32 %v1131
        %v1172 = vcvt.s32.f32 %v1132
        %v1173 = vcvt.s32.f32 %v1133
        %v1174 = vcvt.s32.f32 %v1134
        %v1175 = vcvt.s32.f32 %v1135
        %v1176 = vcvt.s32.f32 %v1136
        %v1177 = vcvt.s32.f32 %v1137
        %v1178 = vcvt.s32.f32 %v1138
        %v1179 = vcvt.s32.f32 %v1139
        %v1180 = vcvt.s32.f32 %v1140
        %v1181 = vcvt.s32.f32 %v1141
        %v1182 = vcvt.s32.f32 %v1142
        %v1183 = vcvt.s32.f32 %v1143
        %v1184 = vcvt.s32.f32 %v1144
        %v1185 = vcvt.s32.f32 %v1145
        %v1186 = vcvt.s32.f32 %v1146
        %v1187 = vcvt.s32.f32 %v1147
        %v1188 = vcvt.s32.f32 %v1148
        %v1189 = vcvt.s32.f32 %v1149
        %v1190 = vcvt.s32.f32 %v1150
        %v1191 = vcvt.s32.f32 %v1151
        %v1192 = vcvt.s32.f32 %v1152
        %v1193 = vcvt.s32.f32 %v1153
        %v1194 = vcvt.s32.f32 %v1154
        %v1195 = vcvt.s32.f32 %v1155
        %v1196 = vcvt.s32.f32 %v1156
        %v1197 = vcvt.s32.f32 %v1157
        %v1198 = vcvt.s32.f32 %v1158
        %v1199 = vcvt.s32.f32 %v1159
        %v1200 = vcvt.s32.f32 %v1160
        %v1201 = vcvt.s32.f32 %v1161
        %v1202 = vcvt.s32.f32 %v1162
        %v1203 = vcvt.s32.f32 %v1163
        %v1204 = vcvt.s32.f32 %v1164
        %v1205 = vcvt.s32.f32 %v1165
        %v1206 = vcvt.s32.f32 %v1166
        %v1207 = vcvt.s32.f32 %v1167
        %v1208 = vcvt.s32.f32 %v1168
        %v1209 = vcvt.s32.f32 %v1169
        %v1210 = vcvt.s32.f32 %v1170
        %v1211 = vld [vmem:[%s282] sm:$0xff]
        %v1212 = vld [vmem:[%s282 + $0x8] sm:$0xff]
        %v1213 = vld [vmem:[%s282 + $0x10] sm:$0xff]
        %v1214 = vld [vmem:[%s282 + $0x18] sm:$0xff]
        %v1215 = vld [vmem:[%s282 + $0x20] sm:$0xff]
        %v1216 = vld [vmem:[%s282 + $0x28] sm:$0xff]
        %v1217 = vld [vmem:[%s282 + $0x30] sm:$0xff]
        %v1218 = vld [vmem:[%s282 + $0x38] sm:$0xff]
        %v1219 = vld [vmem:[%s282 + $0x40] sm:$0xff]
        %v1220 = vld [vmem:[%s282 + $0x48] sm:$0xff]
        %v1221 = vld [vmem:[%s282 + $0x50] sm:$0xff]
        %v1222 = vld [vmem:[%s282 + $0x58] sm:$0xff]
        %v1224 = vsel %vm798, %v1213, 0
        %v1227 = vsel %vm798, %v1216, 0
        %v1230 = vsel %vm798, %v1219, 0
        %v1233 = vsel %vm798, %v1222, 0
        %1235 = vmatprep.subr.mxu0 0.0
        %1236 = vmatpush1.msra.mxu0 %v1171
        %1237 = vmatprep.subr.mxu0 0.0
        %1238 = vmatpush1.msra.mxu0 %v1172
        %1239 = vmatprep.subr.mxu0 0.0
        %1240 = vmatpush1.msra.mxu0 %v1173
        %1241 = vmatprep.subr.mxu0 0.0
        %1242 = vmatpush1.msra.mxu0 %v1174
        %1243 = vmatprep.subr.mxu0 0.0
        %1244 = vmatpush1.msra.mxu0 %v1175
        %1245 = vmatprep.subr.mxu0 0.0
        %1246 = vmatpush1.msra.mxu0 %v1176
        %1247 = vmatprep.subr.mxu0 0.0
        %1248 = vmatpush1.msra.mxu0 %v1177
        %1249 = vmatprep.subr.mxu0 0.0
        %1250 = vmatpush1.msra.mxu0 %v1178
        %1251 = vmatprep.subr.mxu0 0.0
        %1252 = vmatpush1.msra.mxu0 %v1179
        %1253 = vmatprep.subr.mxu0 0.0
        %1254 = vmatpush1.msra.mxu0 %v1180
        %1255 = vmatprep.subr.mxu0 0.0
        %1256 = vmatpush1.msra.mxu0 %v1181
        %1257 = vmatprep.subr.mxu0 0.0
        %1258 = vmatpush1.msra.mxu0 %v1182
        %1259 = vmatprep.subr.mxu0 0.0
        %1260 = vmatpush1.msra.mxu0 %v1183
        %1261 = vmatprep.subr.mxu0 0.0
        %1262 = vmatpush1.msra.mxu0 %v1184
        %1263 = vmatprep.subr.mxu0 0.0
        %1264 = vmatpush1.msra.mxu0 %v1185
        %1265 = vmatprep.subr.mxu0 0.0
        %1266 = vmatpush1.msra.mxu0 %v1186
        %1267 = vmatprep.subr.mxu0 0.0
        %1268 = vmatpush1.msra.mxu0 %v1187
        %1269 = vmatprep.subr.mxu0 0.0
        %1270 = vmatpush1.msra.mxu0 %v1188
        %1271 = vmatprep.subr.mxu0 0.0
        %1272 = vmatpush1.msra.mxu0 %v1189
        %1273 = vmatprep.subr.mxu0 0.0
        %1274 = vmatpush1.msra.mxu0 %v1190
        %1275 = vmatprep.subr.mxu0 0.0
        %1276 = vmatpush1.msra.mxu0 %v1191
        %1277 = vmatprep.subr.mxu0 0.0
        %1278 = vmatpush1.msra.mxu0 %v1192
        %1279 = vmatprep.subr.mxu0 0.0
        %1280 = vmatpush1.msra.mxu0 %v1193
        %1281 = vmatprep.subr.mxu0 0.0
        %1282 = vmatpush1.msra.mxu0 %v1194
        %1283 = vmatprep.subr.mxu0 0.0
        %1284 = vmatpush1.msra.mxu0 %v1195
        %1285 = vmatprep.subr.mxu0 0.0
        %1286 = vmatpush1.msra.mxu0 %v1196
        %1287 = vmatprep.subr.mxu0 0.0
        %1288 = vmatpush1.msra.mxu0 %v1197
        %1289 = vmatprep.subr.mxu0 0.0
        %1290 = vmatpush1.msra.mxu0 %v1198
        %1291 = vmatprep.subr.mxu0 0.0
        %1292 = vmatpush1.msra.mxu0 %v1199
        %1293 = vmatprep.subr.mxu0 0.0
        %1294 = vmatpush1.msra.mxu0 %v1200
        %1295 = vmatprep.subr.mxu0 0.0
        %1296 = vmatpush1.msra.mxu0 %v1201
        %1297 = vmatprep.subr.mxu0 0.0
        %1298 = vmatpush1.msra.mxu0 %v1202
        %1299 = vmatprep.mubr.f32.mxu0 %v1212
        %1300 = vmatmul.mubr.f32.gmra.mrb[0].mxu0 %v1211
        %v1301 = vpop.f32.mrb[0].mxu0
        %v1302 = vadd.f32 0.0, %v1301
        %v1303 = vpop.f32.mrb[0].mxu0
        %1304 = vmatprep.mubr.f32.mxu0 %v1215
        %1305 = vmatmul.mubr.f32.gmra.mrb[0].mxu0 %v1214
        %v1306 = vpop.f32.mrb[0].mxu0
        %v1307 = vadd.f32 0.0, %v1306
        %v1308 = vpop.f32.mrb[0].mxu0
        %1309 = vmatprep.mubr.f32.mxu0 %v1218
        %1310 = vmatmul.mubr.f32.gmra.mrb[0].mxu0 %v1217
        %v1311 = vpop.f32.mrb[0].mxu0
        %v1312 = vadd.f32 0.0, %v1311
        %v1313 = vpop.f32.mrb[0].mxu0
        %1314 = vmatprep.mubr.f32.mxu0 %v1221
        %1315 = vmatmul.mubr.f32.gmra.mrb[0].mxu0 %v1220
        %v1316 = vpop.f32.mrb[0].mxu0
        %v1317 = vadd.f32 0.0, %v1316
        %v1318 = vpop.f32.mrb[0].mxu0
        %1319 = vdwg.mxu0
        %1320 = vmatprep.subr.mxu0 0.0
        %1321 = vmatpush1.msra.mxu0 %v1203
        %1322 = vmatprep.subr.mxu0 0.0
        %1323 = vmatpush1.msra.mxu0 %v1204
        %1324 = vmatprep.subr.mxu0 0.0
        %1325 = vmatpush1.msra.mxu0 %v1205
        %1326 = vmatprep.subr.mxu0 0.0
        %1327 = vmatpush1.msra.mxu0 %v1206
        %1328 = vmatprep.subr.mxu0 0.0
        %1329 = vmatpush1.msra.mxu0 %v1207
        %1330 = vmatprep.subr.mxu0 0.0
        %1331 = vmatpush1.msra.mxu0 %v1208
        %1332 = vmatprep.subr.mxu0 0.0
        %1333 = vmatpush1.msra.mxu0 %v1209
        %1334 = vmatprep.subr.mxu0 0.0
        %1335 = vmatpush1.msra.mxu0 %v1210
        %1336 = vmatprep.subr.mxu0 0.0
        %1337 = vmatpush1.msra.mxu0 0.0
        %1338 = vmatprep.subr.mxu0 0.0
        %1339 = vmatpush1.msra.mxu0 0.0
        %1340 = vmatprep.subr.mxu0 0.0
        %1341 = vmatpush1.msra.mxu0 0.0
        %1342 = vmatprep.subr.mxu0 0.0
        %1343 = vmatpush1.msra.mxu0 0.0
        %1344 = vmatprep.subr.mxu0 0.0
        %1345 = vmatpush1.msra.mxu0 0.0
        %1346 = vmatprep.subr.mxu0 0.0
        %1347 = vmatpush1.msra.mxu0 0.0
        %1348 = vmatprep.subr.mxu0 0.0
        %1349 = vmatpush1.msra.mxu0 0.0
        %1350 = vmatprep.subr.mxu0 0.0
        %1351 = vmatpush1.msra.mxu0 0.0
        %1352 = vmatprep.subr.mxu0 0.0
        %1353 = vmatpush1.msra.mxu0 0.0
        %1354 = vmatprep.subr.mxu0 0.0
        %1355 = vmatpush1.msra.mxu0 0.0
        %1356 = vmatprep.subr.mxu0 0.0
        %1357 = vmatpush1.msra.mxu0 0.0
        %1358 = vmatprep.subr.mxu0 0.0
        %1359 = vmatpush1.msra.mxu0 0.0
        %1360 = vmatprep.subr.mxu0 0.0
        %1361 = vmatpush1.msra.mxu0 0.0
        %1362 = vmatprep.subr.mxu0 0.0
        %1363 = vmatpush1.msra.mxu0 0.0
        %1364 = vmatprep.subr.mxu0 0.0
        %1365 = vmatpush1.msra.mxu0 0.0
        %1366 = vmatprep.subr.mxu0 0.0
        %1367 = vmatpush1.msra.mxu0 0.0
        %1368 = vmatprep.subr.mxu0 0.0
        %1369 = vmatpush1.msra.mxu0 0.0
        %1370 = vmatprep.subr.mxu0 0.0
        %1371 = vmatpush1.msra.mxu0 0.0
        %1372 = vmatprep.subr.mxu0 0.0
        %1373 = vmatpush1.msra.mxu0 0.0
        %1374 = vmatprep.subr.mxu0 0.0
        %1375 = vmatpush1.msra.mxu0 0.0
        %1376 = vmatprep.subr.mxu0 0.0
        %1377 = vmatpush1.msra.mxu0 0.0
        %1378 = vmatprep.subr.mxu0 0.0
        %1379 = vmatpush1.msra.mxu0 0.0
        %1380 = vmatprep.subr.mxu0 0.0
        %1381 = vmatpush1.msra.mxu0 0.0
        %1382 = vmatprep.subr.mxu0 0.0
        %1383 = vmatpush1.msra.mxu0 0.0
        %1384 = vmatprep.mubr.f32.mxu0 0.0
        %1385 = vmatmul.mubr.f32.gmra.mrb[0].mxu0 %v1224
        %v1386 = vpop.f32.mrb[0].mxu0
        %v1387 = vadd.f32 %v1302, %v1386
        %v1388 = vpop.f32.mrb[0].mxu0
        %1389 = vmatprep.mubr.f32.mxu0 0.0
        %1390 = vmatmul.mubr.f32.gmra.mrb[0].mxu0 %v1227
        %v1391 = vpop.f32.mrb[0].mxu0
        %v1392 = vadd.f32 %v1307, %v1391
        %v1393 = vpop.f32.mrb[0].mxu0
        %1394 = vmatprep.mubr.f32.mxu0 0.0
        %1395 = vmatmul.mubr.f32.gmra.mrb[0].mxu0 %v1230
        %v1396 = vpop.f32.mrb[0].mxu0
        %v1397 = vadd.f32 %v1312, %v1396
        %v1398 = vpop.f32.mrb[0].mxu0
        %1399 = vmatprep.mubr.f32.mxu0 0.0
        %1400 = vmatmul.mubr.f32.gmra.mrb[0].mxu0 %v1233
        %v1401 = vpop.f32.mrb[0].mxu0
        %v1402 = vadd.f32 %v1317, %v1401
        %v1403 = vpop.f32.mrb[0].mxu0
        %1404 = vdwg.mxu0
        %v1405 = vld [vmem:[#allocation3] sm:$0x1]
        %vm1406 = vcmp.gt.f32.partialorder %v883, %v1405
        %v1407 = vsel %vm1406, %v883, %v1405
        %vm1408 = vcmask 516096
        %1409 = vst.msk [vmem:[#allocation3] sm:$0x1] %vm1408, %v1407
        %s1410 = smul.u32 %s29, 320
        %v1411 = vstv %s1410
        %v1412 = vadd.s32 %v1411, %v1090
        %v1413 = vld [vmem:[#allocation4] sm:$0x1]
        %v1414 = vsel %vm1406, %v1412, %v1413
        %1415 = vst.msk [vmem:[#allocation4] sm:$0x1] %vm1408, %v1414
        %v1416 = vld [vmem:[#allocation5] sm:$0xff]
        %v1417 = vld [vmem:[#allocation5 + $0x8] sm:$0xff]
        %v1418 = vld [vmem:[#allocation5 + $0x10] sm:$0xff]
        %v1419 = vld [vmem:[#allocation5 + $0x18] sm:$0xff]
        %v1420 = vsel %vm1406, 1, 0
        %v1421 = vlaneseq
        %v1422 = vshrl.u32 %v1421, 7
        %v1423 = vsub.s32 0, %v1422
        %v1424 = vrot.slane %v1420, %v1423
        %vm1425 = vcmp.eq.s32.totalorder %v1424, 1
        %v1426 = vsel %vm1425, %v1387, %v1416
        %v1427 = vsel %vm1425, %v1392, %v1417
        %v1428 = vsel %vm1425, %v1397, %v1418
        %v1429 = vsel %vm1425, %v1402, %v1419
        %1430 = vst.msk [vmem:[#allocation5] sm:$0xff] %vm798, %v1426
        %1431 = vst.msk [vmem:[#allocation5 + $0x8] sm:$0xff] %vm798, %v1427
        %1432 = vst.msk [vmem:[#allocation5 + $0x10] sm:$0xff] %vm798, %v1428
        %1433 = vst.msk [vmem:[#allocation5 + $0x18] sm:$0xff] %vm798, %v1429
        // Predicated region
        $region37: #{tpu_custom_call.1} parent=31 // pred_check
          %p1434 = pneg %p284
        $region38: #{tpu_custom_call.1} parent=31 // pred_check_branch
          %1436 = sbr.rel (%p1434) target = $region40
        $region39: #{tpu_custom_call.1} parent=31 // pred_region
          %v1437 = vld [vmem:[#allocation5] sm:$0xff]
          %v1438 = vld [vmem:[#allocation5 + $0x8] sm:$0xff]
          %v1439 = vld [vmem:[#allocation5 + $0x10] sm:$0xff]
          %v1440 = vld [vmem:[#allocation5 + $0x18] sm:$0xff]
          %1441 = vst.msk [vmem:[%s257] sm:$0xff] %vm798, %v1437
          %1442 = vst.msk [vmem:[%s257 + $0x8] sm:$0xff] %vm798, %v1438
          %1443 = vst.msk [vmem:[%s257 + $0x10] sm:$0xff] %vm798, %v1439
          %1444 = vst.msk [vmem:[%s257 + $0x18] sm:$0xff] %vm798, %v1440
          %v1445 = vld [vmem:[#allocation4] sm:$0x1]
          %1446 = vst.msk [vmem:[%s263] sm:$0x1] %vm1408, %v1445
        $region40: #{tpu_custom_call.1} parent=31 // pred_fallthru
          _
        %s1447 = sand.u32 %s131, 1
        %s1448 = scalar_lea.sflag [#allocation7], %s1447
        %s1449 = sand.u32 %s131, 1
        %s1450 = smul.addr %s1449, 32
        %s1451 = scalar_lea.vmem [#allocation6], %s1450
        %s1452 = sand.u32 %s159, 1
        %s1453 = scalar_lea.sflag [#allocation9], %s1452
        %s1454 = sand.u32 %s159, 1
        %s1455 = scalar_lea.vmem [#allocation8], %s1454
        // Predicated region
        $region41: #{tpu_custom_call.1} parent=31 // pred_check
          %p1456 = pneg %p141
        $region42: #{tpu_custom_call.1} parent=31 // pred_check_branch
          %1458 = sbr.rel (%p1456) target = $region44
        $region43: #{tpu_custom_call.1} parent=31 // pred_region
          %s1460 = ssub.s32 512, 512
          %1461 = vsyncadd %s1448, %s1460
          %s1462 = smul.addr %s27, 4
          %s1463 = sadd.s32 %s28, %s1462
          %s1464 = smul.addr %s1463, 128
          %s1465 = scalar_lea.hbm %s3, %s1464
          %s1466 = sshll.u32 %s1451, 4
          %s1467 = int_to_ptr.vmem [resolvable:$true] %s1466
          %1472 = dma.vmem_to_hbm [thread:$0]  %s1467, 512, %s1465, %s1448, 128, 128, 8
        $region44: #{tpu_custom_call.1} parent=31 // pred_fallthru
          _
        // Predicated region
        $region45: #{tpu_custom_call.1} parent=31 // pred_check
          %p1473 = pneg %p169
        $region46: #{tpu_custom_call.1} parent=31 // pred_check_branch
          %1475 = sbr.rel (%p1473) target = $region48
        $region47: #{tpu_custom_call.1} parent=31 // pred_region
          %s1477 = ssub.s32 16, 16
          %1478 = vsyncadd %s1453, %s1477
          %s1479 = sadd.s32 %s28, %s27
          %s1480 = smul.addr %s1479, 16
          %s1481 = scalar_lea.hbm %s4, %s1480
          %s1483 = sshll.u32 %s1455, 4
          %s1484 = int_to_ptr.vmem [resolvable:$true] %s1483
          %1486 = dma.vmem_to_hbm [thread:$0]  %s1484, 16, %s1481, %s1453
        $region48: #{tpu_custom_call.1} parent=31 // pred_fallthru
          _
      $region32: #{tpu_custom_call.1} parent=5 // pred_fallthru
        _
      %p1487 = scmp.le.s32.totalorder 2, %s17
      // Predicated region
      $region49: #{tpu_custom_call.1} parent=5 // pred_check
        %p1488 = pneg %p1487
      $region50: #{tpu_custom_call.1} parent=5 // pred_check_branch
        %1490 = sbr.rel (%p1488) target = $region52
      $region51: #{tpu_custom_call.1} parent=5 // pred_region
        %s1491 = ssub.s32 %s17, 2
        // Predicated region
        $region53: #{tpu_custom_call.1} parent=51 // pred_check
          %p1492 = pneg %p147
        $region54: #{tpu_custom_call.1} parent=51 // pred_check_branch
          %1494 = sbr.rel (%p1492) target = $region56
        $region55: #{tpu_custom_call.1} parent=51 // pred_region
          %s1495 = sand.u32 %s132, 1
          %s1496 = scalar_lea.sflag [#allocation7], %s1495
          %s1497 = sand.u32 %s132, 1
          %s1498 = smul.addr %s1497, 32
          %s1499 = scalar_lea.vmem [#allocation6], %s1498
          %1500 = dma.done %s1496, 512
        $region56: #{tpu_custom_call.1} parent=51 // pred_fallthru
          _
        // Predicated region
        $region57: #{tpu_custom_call.1} parent=51 // pred_check
          %p1501 = pneg %p175
        $region58: #{tpu_custom_call.1} parent=51 // pred_check_branch
          %1503 = sbr.rel (%p1501) target = $region60
        $region59: #{tpu_custom_call.1} parent=51 // pred_region
          %s1504 = sand.u32 %s160, 1
          %s1505 = scalar_lea.sflag [#allocation9], %s1504
          %s1506 = sand.u32 %s160, 1
          %s1507 = scalar_lea.vmem [#allocation8], %s1506
          %1508 = dma.done %s1505, 16
        $region60: #{tpu_custom_call.1} parent=51 // pred_fallthru
          _
      $region52: #{tpu_custom_call.1} parent=5 // pred_fallthru
        _
    $region6: #{tpu_custom_call.1} parent=1 // loop_footer
      %s21 = sadd.s32 1, %s17
    $region7: #{tpu_custom_call.1} parent=1 // loop_footer_branch
      %16 = sbr.rel target = $region3
    $region8: #{tpu_custom_call.1} parent=1 // loop_exit
      _
    %1509 = vsyncpa [#allocation7], 1
    %s1510 = scalar_lea.sflag [#allocation7], 1
    %1511 = vsyncpa %s1510, 1
    %1512 = vsyncpa [#allocation9], 1
    %s1513 = scalar_lea.sflag [#allocation9], 1
    %1514 = vsyncpa %s1513, 1

</llo_original>
